<compile_context>
chip_gen: v7x
topology: tpu7x:2x2x1
jax: 0.10.0
libtpu: 0.0.40
codegen_flags: <defaults>
</compile_context>

<pallas_src>
import math

import jax
import jax.numpy as jnp
from jax.experimental import pallas as pl
from jax.experimental.pallas import tpu as pltpu

_NEG_BIG = -1e30  # finite "-inf" for padded vocab columns (avoids inf-inf NaN)


def _round_up(n, m):
    return ((n + m - 1) // m) * m


def _vmem_budget_bytes():
    """~75% of per-core VMEM (generation-aware), conservative fallback."""
    cap = None
    try:
        cap = getattr(pltpu.get_tpu_info(), "vmem_capacity_bytes", None)
    except Exception:
        cap = None
    if not cap:
        cap = 64 * 1024 * 1024  # assume smallest (v7x-like) per-core VMEM
    return (int(cap) * 3) // 4


def _choose_row_tile(n_rows, row_tile):
    """Multiple of 8 sublanes; prefer >=2 grid steps so both TCs get work."""
    n8 = _round_up(max(n_rows, 1), 8)
    t = min(_round_up(row_tile, 8), n8)
    if n8 // t < 2 and n8 >= 16:
        t = _round_up((n8 + 1) // 2, 8)
    return max(t, 8)


def prepare_generator_params(weight, bias, *, lane_multiple=128):
    """One-time packing of nn.Linear params for the fused generator kernel.

    weight: (vocab, d_model)  -- nn.Linear layout; bias: (vocab,)
    Returns (w_t, b2, vocab) with w_t: (d_model, vocab_padded) and
    b2: (1, vocab_padded).  Padded vocab columns get zero weights and a very
    negative bias so they never affect the log-softmax.  Call once at
    parameter-setup time, NOT per forward (hoists the transpose/copy).
    """
    V, D = weight.shape
    Vp = _round_up(V, lane_multiple)
    w_t = jnp.swapaxes(weight, 0, 1)          # (D, V), native dtype
    b2 = bias.reshape(1, V)
    if Vp != V:
        w_t = jnp.pad(w_t, ((0, 0), (0, Vp - V)))
        b2 = jnp.pad(b2, ((0, 0), (0, Vp - V)), constant_values=_NEG_BIG)
    return w_t, b2, V


# ----------------------------- kernels --------------------------------------


def _fused_kernel(x_ref, w_ref, b_ref, o_ref):
    """One row tile, whole vocab resident: out = log_softmax(x @ W_t + b)."""
    logits = jnp.dot(x_ref[...], w_ref[...],
                     preferred_element_type=jnp.float32)          # MXU, f32 acc
    logits = logits + b_ref[...].astype(jnp.float32)
    m = jnp.max(logits, axis=-1, keepdims=True)                   # XLU lane reduce
    shifted = logits - m
    lse = jnp.log(jnp.sum(jnp.exp(shifted), axis=-1, keepdims=True))
    o_ref[...] = (shifted - lse).astype(o_ref.dtype)


def _logits_lse_kernel(x_ref, w_ref, b_ref, logits_ref, lse_ref, m_sc, s_sc):
    """Vocab-tiled sweep: write logits tile, keep an online logsumexp."""
    j = pl.program_id(1)

    @pl.when(j == 0)
    def _():
        m_sc[...] = jnp.full_like(m_sc, _NEG_BIG)
        s_sc[...] = jnp.zeros_like(s_sc)

    logits = jnp.dot(x_ref[...], w_ref[...],
                     preferred_element_type=jnp.float32)
    logits = logits + b_ref[...].astype(jnp.float32)
    logits_ref[...] = logits

    m_prev = m_sc[...]
    m_new = jnp.maximum(m_prev, jnp.max(logits, axis=-1, keepdims=True))
    s_sc[...] = (s_sc[...] * jnp.exp(m_prev - m_new)
                 + jnp.sum(jnp.exp(logits - m_new), axis=-1, keepdims=True))
    m_sc[...] = m_new

    @pl.when(j == pl.num_programs(1) - 1)
    def _():
        lse_ref[...] = m_sc[...] + jnp.log(s_sc[...])


def _sub_lse_kernel(logits_ref, lse_ref, o_ref):
    o_ref[...] = (logits_ref[...] - lse_ref[...]).astype(o_ref.dtype)


# ----------------------------- wrappers -------------------------------------


def _call_resident(x2, w_t, b2, out_dtype, T, vmem_limit, single_buffer_params):
    Np, D = x2.shape
    Vp = w_t.shape[1]
    if single_buffer_params:
        w_spec = pl.BlockSpec((D, Vp), lambda i: (0, 0),
                              pipeline_mode=pl.Buffered(1))
        b_spec = pl.BlockSpec((1, Vp), lambda i: (0, 0),
                              pipeline_mode=pl.Buffered(1))
    else:
        w_spec = pl.BlockSpec((D, Vp), lambda i: (0, 0))
        b_spec = pl.BlockSpec((1, Vp), lambda i: (0, 0))
    return pl.pallas_call(
        _fused_kernel,
        out_shape=jax.ShapeDtypeStruct((Np, Vp), out_dtype),
        grid=(Np // T,),
        in_specs=[
            pl.BlockSpec((T, D), lambda i: (i, 0)),   # activations (streamed)
            w_spec,                                   # weight (grid-invariant)
            b_spec,                                   # bias   (grid-invariant)
        ],
        out_specs=pl.BlockSpec((T, Vp), lambda i: (i, 0)),
        compiler_params=pltpu.CompilerParams(
            dimension_semantics=("parallel",),
            vmem_limit_bytes=vmem_limit,
        ),
    )(x2, w_t, b2)


def _call_vocab_tiled(x2, w_t, b2, out_dtype, T, Vt, vmem_limit):
    Np, D = x2.shape
    Vp = w_t.shape[1]
    grid = (Np // T, Vp // Vt)

    logits, lse = pl.pallas_call(
        _logits_lse_kernel,
        out_shape=(jax.ShapeDtypeStruct((Np, Vp), jnp.float32),
                   jax.ShapeDtypeStruct((Np, 1), jnp.float32)),
        grid=grid,
        in_specs=[
            pl.BlockSpec((T, D), lambda i, j: (i, 0)),
            pl.BlockSpec((D, Vt), lambda i, j: (0, j)),
            pl.BlockSpec((1, Vt), lambda i, j: (0, j)),
        ],
        out_specs=[pl.BlockSpec((T, Vt), lambda i, j: (i, j)),
                   pl.BlockSpec((T, 1), lambda i, j: (i, 0))],
        scratch_shapes=[pltpu.VMEM((T, 1), jnp.float32),
                        pltpu.VMEM((T, 1), jnp.float32)],
        compiler_params=pltpu.CompilerParams(
            dimension_semantics=("parallel", "arbitrary"),
            vmem_limit_bytes=vmem_limit,
        ),
    )(x2, w_t, b2)

    return pl.pallas_call(
        _sub_lse_kernel,
        out_shape=jax.ShapeDtypeStruct((Np, Vp), out_dtype),
        grid=grid,
        in_specs=[
            pl.BlockSpec((T, Vt), lambda i, j: (i, j)),
            pl.BlockSpec((T, 1), lambda i, j: (i, 0)),
        ],
        out_specs=pl.BlockSpec((T, Vt), lambda i, j: (i, j)),
        compiler_params=pltpu.CompilerParams(
            dimension_semantics=("parallel", "parallel"),
            vmem_limit_bytes=vmem_limit,
        ),
    )(logits, lse)


def generator_log_softmax(x, w_t, b2, vocab=None, *, row_tile=None,
                          vocab_tile=None):
    """Mirrors Generator.forward(x) = F.log_softmax(x @ W.T + b, dim=-1).

    x:     (..., d_model)
    w_t:   (d_model, vocab_padded)  -- from prepare_generator_params
    b2:    (1, vocab_padded)
    vocab: true vocab size (default: padded size)
    """
    *lead, D = x.shape
    Dw, Vp = w_t.shape
    assert D == Dw, "d_model mismatch between x and proj weight"
    V = Vp if vocab is None else vocab
    out_dtype = x.dtype
    N = int(math.prod(lead)) if lead else 1

    x2 = x.reshape(N, D)
    if x2.dtype != w_t.dtype:          # feed the MXU the params' native dtype
        x2 = x2.astype(w_t.dtype)

    budget = _vmem_budget_bytes()
    if row_tile is None:
        row_tile = 128 if Vp >= 4096 else 256   # bound (T, V) f32 intermediates
    T = _choose_row_tile(N, row_tile)
    Np = _round_up(N, T)
    if Np != N:
        x2 = jnp.pad(x2, ((0, Np - N), (0, 0)))

    # Does the resident-weight path fit?  single weight copy + double-buffered
    # x/out blocks + ~3 live f32 (T, Vp) intermediates of the softmax chain.
    w_item = jnp.dtype(w_t.dtype).itemsize
    resident_bytes = (Vp * D * w_item
                      + 2 * T * D * jnp.dtype(x2.dtype).itemsize
                      + 2 * T * Vp * jnp.dtype(out_dtype).itemsize
                      + 3 * T * Vp * 4)
    force_tiled = vocab_tile is not None
    out = None

    if not force_tiled and resident_bytes <= budget:
        # Try single-buffered grid-invariant params first; fall back to the
        # default double-buffered specs, then to the vocab-tiled path.
        for single in (True, False):
            try:
                out = _call_resident(x2, w_t, b2, out_dtype, T, budget, single)
                break
            except Exception:
                continue

    if out is None:
        assert Vp % 128 == 0, "use prepare_generator_params for the tiled path"
        Vt = 2048 if vocab_tile is None else vocab_tile
        Vt = min(_round_up(Vt, 128), Vp)
        if Vp % Vt != 0:
            Vt = 128
            while Vp % (Vt * 2) == 0 and (Vt * 2) <= 2048:
                Vt *= 2
        tiled_limit = min(budget, 64 * 1024 * 1024)
        out = _call_vocab_tiled(x2, w_t, b2, out_dtype, T, Vt, tiled_limit)

    if Np != N:
        out = out[:N]
    if Vp != V:
        out = out[:, :V]
    return out.reshape(*lead, V) if lead else out.reshape(V)


def _ref(x, weight, bias):
    """Pure-JAX reference matching the PyTorch module."""
    logits = jnp.einsum("...d,vd->...v", x.astype(jnp.float32),
                        weight.astype(jnp.float32)) + bias.astype(jnp.float32)
    return jax.nn.log_softmax(logits, axis=-1).astype(x.dtype)


if __name__ == "__main__":
    k1, k2, k3, k4, k5, k6 = jax.random.split(jax.random.PRNGKey(0), 6)

    # ---- Path 1: resident-weight fused kernel (small/medium vocab) ----------
    B, S, D, V = 2, 8, 32, 128
    x = jax.random.normal(k1, (B, S, D), jnp.float32)
    weight = jax.random.normal(k2, (V, D), jnp.float32) * 0.05   # nn.Linear.weight
    bias = jax.random.normal(k3, (V,), jnp.float32) * 0.05       # nn.Linear.bias

    w_t, b2, vocab = prepare_generator_params(weight, bias)      # one-time setup
    out = generator_log_softmax(x, w_t, b2, vocab)
    jax.block_until_ready(out)

    ref = _ref(x, weight, bias)
    assert out.shape == (B, S, V)
    assert jnp.allclose(out, ref, atol=1e-5, rtol=1e-5), "log_softmax mismatch"
    assert jnp.allclose(jnp.exp(out).sum(-1), 1.0, atol=1e-5), "normalization off"

    # ---- Path 2: vocab-tiled online-logsumexp (large-vocab / v7x fallback) --
    B2, S2, V2 = 3, 5, 320        # ragged rows + non-128-multiple vocab
    x_b = jax.random.normal(k4, (B2, S2, D), jnp.float32)
    weight_b = jax.random.normal(k5, (V2, D), jnp.float32) * 0.05
    bias_b = jax.random.normal(k6, (V2,), jnp.float32) * 0.05

    w_t_b, b2_b, vocab_b = prepare_generator_params(weight_b, bias_b)
    out_b = generator_log_softmax(x_b, w_t_b, b2_b, vocab_b, vocab_tile=128)
    jax.block_until_ready(out_b)

    ref_b = _ref(x_b, weight_b, bias_b)
    assert out_b.shape == (B2, S2, V2)
    assert jnp.allclose(out_b, ref_b, atol=2e-5, rtol=2e-5), "tiled path mismatch"
    assert jnp.allclose(jnp.exp(out_b).sum(-1), 1.0, atol=1e-5), "tiled norm off"

    print("KERNEL_OK")
</pallas_src>

<mosaic_0001>
module attributes {stable_mosaic.version = 11 : i64} {
  func.func @_fused_kernel(%arg0: i32, %arg1: memref<8x32xf32, #tpu.memory_space<vmem>>, %arg2: memref<32x128xf32, #tpu.memory_space<vmem>>, %arg3: memref<1x128xf32, #tpu.memory_space<vmem>>, %arg4: memref<8x128xf32, #tpu.memory_space<vmem>>) attributes {dimension_semantics = [#tpu.dimension_semantics<parallel>], iteration_bounds = array<i64: 2>, scalar_prefetch = 0 : i64, scratch_operands = 0 : i64, tpu.core_type = #tpu.core_type<tc>, window_params = [{transform_indices = @transform_0, window_bounds = array<i64: 8, 32>}, {pipeline_mode = #tpu.pipeline_mode<synchronous>, transform_indices = @transform_1, window_bounds = array<i64: 32, 128>}, {pipeline_mode = #tpu.pipeline_mode<synchronous>, transform_indices = @transform_2, window_bounds = array<i64: 1, 128>}, {transform_indices = @transform_3, window_bounds = array<i64: 8, 128>}]} {
    %c0 = arith.constant 0 : index
    %c0_0 = arith.constant 0 : index
    %0 = vector.load %arg1[%c0, %c0_0] : memref<8x32xf32, #tpu.memory_space<vmem>>, vector<8x32xf32>
    %c0_1 = arith.constant 0 : index
    %c0_2 = arith.constant 0 : index
    %1 = vector.load %arg2[%c0_1, %c0_2] : memref<32x128xf32, #tpu.memory_space<vmem>>, vector<32x128xf32>
    %cst = arith.constant dense<0.000000e+00> : vector<8x128xf32>
    %2 = tpu.matmul %0, %1, %cst {dimension_numbers = #tpu.dot_dimension_numbers<[1], [0], [0], [1], [0, 0, 1, 1], [], []>} : vector<8x32xf32>, vector<32x128xf32>, vector<8x128xf32> -> vector<8x128xf32>
    %c0_3 = arith.constant 0 : index
    %c0_4 = arith.constant 0 : index
    %3 = vector.load %arg3[%c0_3, %c0_4] : memref<1x128xf32, #tpu.memory_space<vmem>>, vector<1x128xf32>
    %4 = vector.broadcast %3 : vector<1x128xf32> to vector<8x128xf32>
    %5 = arith.addf %2, %4 : vector<8x128xf32>
    %cst_5 = arith.constant dense<0xFF800000> : vector<8xf32>
    %6 = vector.multi_reduction <maximumf>, %5, %cst_5 [1] : vector<8x128xf32> to vector<8xf32>
    %7 = vector.shape_cast %6 : vector<8xf32> to vector<8x1xf32>
    %8 = vector.broadcast %7 : vector<8x1xf32> to vector<8x128xf32>
    %9 = arith.subf %5, %8 : vector<8x128xf32>
    %10 = math.exp %9 : vector<8x128xf32>
    %cst_6 = arith.constant dense<0.000000e+00> : vector<8xf32>
    %11 = vector.multi_reduction <add>, %10, %cst_6 [1] : vector<8x128xf32> to vector<8xf32>
    %12 = vector.shape_cast %11 : vector<8xf32> to vector<8x1xf32>
    %13 = math.log %12 : vector<8x1xf32>
    %14 = vector.broadcast %13 : vector<8x1xf32> to vector<8x128xf32>
    %15 = arith.subf %9, %14 : vector<8x128xf32>
    %c0_7 = arith.constant 0 : index
    %c0_8 = arith.constant 0 : index
    %16 = vector.load %arg4[%c0_7, %c0_8] : memref<8x128xf32, #tpu.memory_space<vmem>>, vector<8x128xf32>
    tpu.vector_store %arg4[%c0_7, %c0_8], %15 {strides = array<i32>} : memref<8x128xf32, #tpu.memory_space<vmem>>, vector<8x128xf32>,
    return
  }
  func.func @transform_0(%arg0: i32) -> (i32, i32) {
    %c0_i32 = arith.constant 0 : i32
    %c0_i32_0 = arith.constant 0 : i32
    return %arg0, %c0_i32 : i32, i32
  }
  func.func @transform_1(%arg0: i32) -> (i32, i32) {
    %c0_i32 = arith.constant 0 : i32
    %c0_i32_0 = arith.constant 0 : i32
    %c0_i32_1 = arith.constant 0 : i32
    return %c0_i32, %c0_i32_0 : i32, i32
  }
  func.func @transform_2(%arg0: i32) -> (i32, i32) {
    %c0_i32 = arith.constant 0 : i32
    %c0_i32_0 = arith.constant 0 : i32
    %c0_i32_1 = arith.constant 0 : i32
    return %c0_i32, %c0_i32_0 : i32, i32
  }
  func.func @transform_3(%arg0: i32) -> (i32, i32) {
    %c0_i32 = arith.constant 0 : i32
    %c0_i32_0 = arith.constant 0 : i32
    return %arg0, %c0_i32 : i32, i32
  }
}

module attributes {stable_mosaic.version = 11 : i64} {
  func.func @_fused_kernel(%arg0: i32, %arg1: memref<8x32xf32, #tpu.memory_space<vmem>>, %arg2: memref<32x128xf32, #tpu.memory_space<vmem>>, %arg3: memref<1x128xf32, #tpu.memory_space<vmem>>, %arg4: memref<8x128xf32, #tpu.memory_space<vmem>>) attributes {dimension_semantics = [#tpu.dimension_semantics<parallel>], iteration_bounds = array<i64: 2>, scalar_prefetch = 0 : i64, scratch_operands = 0 : i64, tpu.core_type = #tpu.core_type<tc>, window_params = [{transform_indices = @transform_0, window_bounds = array<i64: 8, 32>}, {pipeline_mode = #tpu.pipeline_mode<synchronous>, transform_indices = @transform_1, window_bounds = array<i64: 32, 128>}, {pipeline_mode = #tpu.pipeline_mode<synchronous>, transform_indices = @transform_2, window_bounds = array<i64: 1, 128>}, {transform_indices = @transform_3, window_bounds = array<i64: 8, 128>}]} {
    %c0 = arith.constant 0 : index
    %c0_0 = arith.constant 0 : index
    %0 = vector.load %arg1[%c0, %c0_0] : memref<8x32xf32, #tpu.memory_space<vmem>>, vector<8x32xf32>
    %c0_1 = arith.constant 0 : index
    %c0_2 = arith.constant 0 : index
    %1 = vector.load %arg2[%c0_1, %c0_2] : memref<32x128xf32, #tpu.memory_space<vmem>>, vector<32x128xf32>
    %cst = arith.constant dense<0.000000e+00> : vector<8x128xf32>
    %2 = tpu.matmul %0, %1, %cst {dimension_numbers = #tpu.dot_dimension_numbers<[1], [0], [0], [1], [0, 0, 1, 1], [], []>} : vector<8x32xf32>, vector<32x128xf32>, vector<8x128xf32> -> vector<8x128xf32>
    %c0_3 = arith.constant 0 : index
    %c0_4 = arith.constant 0 : index
    %3 = vector.load %arg3[%c0_3, %c0_4] : memref<1x128xf32, #tpu.memory_space<vmem>>, vector<1x128xf32>
    %4 = vector.broadcast %3 : vector<1x128xf32> to vector<8x128xf32>
    %5 = arith.addf %2, %4 : vector<8x128xf32>
    %cst_5 = arith.constant dense<0xFF800000> : vector<8xf32>
    %6 = vector.multi_reduction <maximumf>, %5, %cst_5 [1] : vector<8x128xf32> to vector<8xf32>
    %7 = vector.shape_cast %6 : vector<8xf32> to vector<8x1xf32>
    %8 = vector.broadcast %7 : vector<8x1xf32> to vector<8x128xf32>
    %9 = arith.subf %5, %8 : vector<8x128xf32>
    %10 = math.exp %9 : vector<8x128xf32>
    %cst_6 = arith.constant dense<0.000000e+00> : vector<8xf32>
    %11 = vector.multi_reduction <add>, %10, %cst_6 [1] : vector<8x128xf32> to vector<8xf32>
    %12 = vector.shape_cast %11 : vector<8xf32> to vector<8x1xf32>
    %13 = math.log %12 : vector<8x1xf32>
    %14 = vector.broadcast %13 : vector<8x1xf32> to vector<8x128xf32>
    %15 = arith.subf %9, %14 : vector<8x128xf32>
    %c0_7 = arith.constant 0 : index
    %c0_8 = arith.constant 0 : index
    %16 = vector.load %arg4[%c0_7, %c0_8] : memref<8x128xf32, #tpu.memory_space<vmem>>, vector<8x128xf32>
    tpu.vector_store %arg4[%c0_7, %c0_8], %15 {strides = array<i32>} : memref<8x128xf32, #tpu.memory_space<vmem>>, vector<8x128xf32>,
    return
  }
  func.func @transform_0(%arg0: i32) -> (i32, i32) {
    %c0_i32 = arith.constant 0 : i32
    %c0_i32_0 = arith.constant 0 : i32
    return %arg0, %c0_i32 : i32, i32
  }
  func.func @transform_1(%arg0: i32) -> (i32, i32) {
    %c0_i32 = arith.constant 0 : i32
    %c0_i32_0 = arith.constant 0 : i32
    %c0_i32_1 = arith.constant 0 : i32
    return %c0_i32, %c0_i32_0 : i32, i32
  }
  func.func @transform_2(%arg0: i32) -> (i32, i32) {
    %c0_i32 = arith.constant 0 : i32
    %c0_i32_0 = arith.constant 0 : i32
    %c0_i32_1 = arith.constant 0 : i32
    return %c0_i32, %c0_i32_0 : i32, i32
  }
  func.func @transform_3(%arg0: i32) -> (i32, i32) {
    %c0_i32 = arith.constant 0 : i32
    %c0_i32_0 = arith.constant 0 : i32
    return %arg0, %c0_i32 : i32, i32
  }
}

module attributes {stable_mosaic.version = 11 : i64} {
  func.func @_logits_lse_kernel(%arg0: i32, %arg1: i32, %arg2: memref<8x32xf32, #tpu.memory_space<vmem>>, %arg3: memref<32x128xf32, #tpu.memory_space<vmem>>, %arg4: memref<1x128xf32, #tpu.memory_space<vmem>>, %arg5: memref<8x128xf32, #tpu.memory_space<vmem>>, %arg6: memref<8x1xf32, #tpu.memory_space<vmem>>, %arg7: memref<8x1xf32, #tpu.memory_space<vmem>>, %arg8: memref<8x1xf32, #tpu.memory_space<vmem>>) attributes {dimension_semantics = [#tpu.dimension_semantics<parallel>, #tpu.dimension_semantics<arbitrary>], iteration_bounds = array<i64: 2, 1>, scalar_prefetch = 0 : i64, scratch_operands = 2 : i64, tpu.core_type = #tpu.core_type<tc>, window_params = [{transform_indices = @transform_0, window_bounds = array<i64: 8, 32>}, {transform_indices = @transform_1, window_bounds = array<i64: 32, 128>}, {transform_indices = @transform_2, window_bounds = array<i64: 1, 128>}, {transform_indices = @transform_3, window_bounds = array<i64: 8, 128>}, {transform_indices = @transform_4, window_bounds = array<i64: 8, 1>}]} {
    %c0_i32 = arith.constant 0 : i32
    %0 = arith.cmpi eq, %arg1, %c0_i32 : i32
    %1 = arith.extui %0 : i1 to i32
    %c0_i32_0 = arith.constant 0 : i32
    %2 = arith.cmpi ne, %1, %c0_i32_0 : i32
    scf.if %2 {
      %cst_20 = arith.constant -1.000000e+30 : f32
      %29 = vector.broadcast %cst_20 : f32 to vector<8x1xf32>
      %c0_21 = arith.constant 0 : index
      %c0_22 = arith.constant 0 : index
      %30 = vector.load %arg7[%c0_21, %c0_22] : memref<8x1xf32, #tpu.memory_space<vmem>>, vector<8x1xf32>
      tpu.vector_store %arg7[%c0_21, %c0_22], %29 {strides = array<i32>} : memref<8x1xf32, #tpu.memory_space<vmem>>, vector<8x1xf32>,
      %cst_23 = arith.constant 0.000000e+00 : f32
      %31 = vector.broadcast %cst_23 : f32 to vector<8x1xf32>
      %c0_24 = arith.constant 0 : index
      %c0_25 = arith.constant 0 : index
      %32 = vector.load %arg8[%c0_24, %c0_25] : memref<8x1xf32, #tpu.memory_space<vmem>>, vector<8x1xf32>
      tpu.vector_store %arg8[%c0_24, %c0_25], %31 {strides = array<i32>} : memref<8x1xf32, #tpu.memory_space<vmem>>, vector<8x1xf32>,
    } else {
    }
    %c0 = arith.constant 0 : index
    %c0_1 = arith.constant 0 : index
    %3 = vector.load %arg2[%c0, %c0_1] : memref<8x32xf32, #tpu.memory_space<vmem>>, vector<8x32xf32>
    %c0_2 = arith.constant 0 : index
    %c0_3 = arith.constant 0 : index
    %4 = vector.load %arg3[%c0_2, %c0_3] : memref<32x128xf32, #tpu.memory_space<vmem>>, vector<32x128xf32>
    %cst = arith.constant dense<0.000000e+00> : vector<8x128xf32>
    %5 = tpu.matmul %3, %4, %cst {dimension_numbers = #tpu.dot_dimension_numbers<[1], [0], [0], [1], [0, 0, 1, 1], [], []>} : vector<8x32xf32>, vector<32x128xf32>, vector<8x128xf32> -> vector<8x128xf32>
    %c0_4 = arith.constant 0 : index
    %c0_5 = arith.constant 0 : index
    %6 = vector.load %arg4[%c0_4, %c0_5] : memref<1x128xf32, #tpu.memory_space<vmem>>, vector<1x128xf32>
    %7 = vector.broadcast %6 : vector<1x128xf32> to vector<8x128xf32>
    %8 = arith.addf %5, %7 : vector<8x128xf32>
    %c0_6 = arith.constant 0 : index
    %c0_7 = arith.constant 0 : index
    %9 = vector.load %arg5[%c0_6, %c0_7] : memref<8x128xf32, #tpu.memory_space<vmem>>, vector<8x128xf32>
    tpu.vector_store %arg5[%c0_6, %c0_7], %8 {strides = array<i32>} : memref<8x128xf32, #tpu.memory_space<vmem>>, vector<8x128xf32>,
    %c0_8 = arith.constant 0 : index
    %c0_9 = arith.constant 0 : index
    %10 = vector.load %arg7[%c0_8, %c0_9] : memref<8x1xf32, #tpu.memory_space<vmem>>, vector<8x1xf32>
    %cst_10 = arith.constant dense<0xFF800000> : vector<8xf32>
    %11 = vector.multi_reduction <maximumf>, %8, %cst_10 [1] : vector<8x128xf32> to vector<8xf32>
    %12 = vector.shape_cast %11 : vector<8xf32> to vector<8x1xf32>
    %13 = arith.maximumf %10, %12 : vector<8x1xf32>
    %c0_11 = arith.constant 0 : index
    %c0_12 = arith.constant 0 : index
    %14 = vector.load %arg8[%c0_11, %c0_12] : memref<8x1xf32, #tpu.memory_space<vmem>>, vector<8x1xf32>
    %15 = arith.subf %10, %13 : vector<8x1xf32>
    %16 = math.exp %15 : vector<8x1xf32>
    %17 = arith.mulf %14, %16 : vector<8x1xf32>
    %18 = vector.broadcast %13 : vector<8x1xf32> to vector<8x128xf32>
    %19 = arith.subf %8, %18 : vector<8x128xf32>
    %20 = math.exp %19 : vector<8x128xf32>
    %cst_13 = arith.constant dense<0.000000e+00> : vector<8xf32>
    %21 = vector.multi_reduction <add>, %20, %cst_13 [1] : vector<8x128xf32> to vector<8xf32>
    %22 = vector.shape_cast %21 : vector<8xf32> to vector<8x1xf32>
    %23 = arith.addf %17, %22 : vector<8x1xf32>
    %c0_14 = arith.constant 0 : index
    %c0_15 = arith.constant 0 : index
    %24 = vector.load %arg8[%c0_14, %c0_15] : memref<8x1xf32, #tpu.memory_space<vmem>>, vector<8x1xf32>
    tpu.vector_store %arg8[%c0_14, %c0_15], %23 {strides = array<i32>} : memref<8x1xf32, #tpu.memory_space<vmem>>, vector<8x1xf32>,
    %c0_16 = arith.constant 0 : index
    %c0_17 = arith.constant 0 : index
    %25 = vector.load %arg7[%c0_16, %c0_17] : memref<8x1xf32, #tpu.memory_space<vmem>>, vector<8x1xf32>
    tpu.vector_store %arg7[%c0_16, %c0_17], %13 {strides = array<i32>} : memref<8x1xf32, #tpu.memory_space<vmem>>, vector<8x1xf32>,
    %c0_i32_18 = arith.constant 0 : i32
    %26 = arith.cmpi eq, %arg1, %c0_i32_18 : i32
    %27 = arith.extui %26 : i1 to i32
    %c0_i32_19 = arith.constant 0 : i32
    %28 = arith.cmpi ne, %27, %c0_i32_19 : i32
    scf.if %28 {
      %c0_20 = arith.constant 0 : index
      %c0_21 = arith.constant 0 : index
      %29 = vector.load %arg7[%c0_20, %c0_21] : memref<8x1xf32, #tpu.memory_space<vmem>>, vector<8x1xf32>
      %c0_22 = arith.constant 0 : index
      %c0_23 = arith.constant 0 : index
      %30 = vector.load %arg8[%c0_22, %c0_23] : memref<8x1xf32, #tpu.memory_space<vmem>>, vector<8x1xf32>
      %31 = math.log %30 : vector<8x1xf32>
      %32 = arith.addf %29, %31 : vector<8x1xf32>
      %c0_24 = arith.constant 0 : index
      %c0_25 = arith.constant 0 : index
      %33 = vector.load %arg6[%c0_24, %c0_25] : memref<8x1xf32, #tpu.memory_space<vmem>>, vector<8x1xf32>
      tpu.vector_store %arg6[%c0_24, %c0_25], %32 {strides = array<i32>} : memref<8x1xf32, #tpu.memory_space<vmem>>, vector<8x1xf32>,
    } else {
    }
    return
  }
  func.func @transform_0(%arg0: i32, %arg1: i32) -> (i32, i32) {
    %c0_i32 = arith.constant 0 : i32
    %c0_i32_0 = arith.constant 0 : i32
    return %arg0, %c0_i32 : i32, i32
  }
  func.func @transform_1(%arg0: i32, %arg1: i32) -> (i32, i32) {
    %c0_i32 = arith.constant 0 : i32
    %c0_i32_0 = arith.constant 0 : i32
    return %c0_i32, %arg1 : i32, i32
  }
  func.func @transform_2(%arg0: i32, %arg1: i32) -> (i32, i32) {
    %c0_i32 = arith.constant 0 : i32
    %c0_i32_0 = arith.constant 0 : i32
    return %c0_i32, %arg1 : i32, i32
  }
  func.func @transform_3(%arg0: i32, %arg1: i32) -> (i32, i32) {
    %c0_i32 = arith.constant 0 : i32
    return %arg0, %arg1 : i32, i32
  }
  func.func @transform_4(%arg0: i32, %arg1: i32) -> (i32, i32) {
    %c0_i32 = arith.constant 0 : i32
    %c0_i32_0 = arith.constant 0 : i32
    return %arg0, %c0_i32 : i32, i32
  }
}

</mosaic_0001>

<llo_original>
// kernel: tpu_custom_call.1
$region0: #{tpu_custom_call.1}
  #allocation0 [shape = 'u32[]', space=smem, size = 0x4, offset = 0x4, fixed_abs, tag = 'smem constant byte address 0x4 - core index']
  #allocation1 [shape = 'u32[144,128]{1,0:T(1,128)}', space=vmem, size = 0x12000, scoped, tag = 'internal scratch']
  %s0 = inlined_call_operand.hbm [shape: f32[16,32], index: 0, kind: input, shape index: {}]
  %s1 = inlined_call_operand.hbm [shape: f32[32,128], index: 1, kind: input, shape index: {}]
  %s2 = inlined_call_operand.vmem [shape: f32[1,128], index: 2, kind: input, shape index: {}]
  %s3 = inlined_call_operand.hbm [shape: f32[16,128], index: 3, kind: output, shape index: {}]
  %s4 = sld [smem:[#allocation0]]
  $region53: #{tpu_custom_call.1} parent=0
    _
  %s6 = ssub.s32 1, %s4
  %s7 = scalar_select 0, %s6, %s4
  $region1: #{tpu_custom_call.1} parent=0
    #allocation2 [shape = 'u8[8192]{0}', space=vmem, size = 0x2000, scoped, tag = 'input window, operand 0']
    #allocation3 [shape = 's32[2]{0}', space=sflag, size = 0x8, scoped, tag = 'scoped memory for tpu_custom_call.1']
    #allocation4 [shape = 's32[2]{0}', space=sflag, size = 0x8, scoped, tag = 'scoped memory for tpu_custom_call.1']
    #allocation5 [shape = 'u8[16384]{0}', space=vmem, size = 0x4000, scoped, tag = 'input window, operand 1, single buffered']
    #allocation6 [shape = 's32[1]{0}', space=sflag, size = 0x4, scoped, tag = 'scoped memory for tpu_custom_call.1']
    #allocation7 [shape = 'u8[8192]{0}', space=vmem, size = 0x2000, scoped, tag = 'output window, operand 0']
    %8 = vsyncpa [#allocation3], 0
    %s9 = scalar_lea.sflag [#allocation3], 1
    %10 = vsyncpa %s9, 0
    %11 = vsyncpa [#allocation6], 0
    %12 = vsyncpa [#allocation4], 0
    %s13 = scalar_lea.sflag [#allocation4], 1
    %14 = vsyncpa %s13, 0
    loop: start=0, step=1, limit=4
    $region2: #{tpu_custom_call.1} parent=1 // loop_pre_header
      _
    $region3: #{tpu_custom_call.1} parent=1 // loop_header
      %s16 = sphi 0, %s20
      %p17 = scmp.ge.s32.totalorder %s16, 4
      %s26 = sphi 0, %s28
      %s29 = sphi 0, %s26
      %s30 = sphi 0, %s29
      %s46 = sphi 0, %s30
      %s50 = sphi 0, %s50
      %s52 = sphi 0, %s50
      %s53 = sphi 0, %s52
      %s67 = sphi 0, %s53
      %s71 = sphi 0, %s71
      %s73 = sphi 0, %s71
      %s74 = sphi 0, %s73
      %s88 = sphi 0, %s74
      %s94 = sphi 0, %s96
      %s97 = sphi 0, %s94
      %s98 = sphi 0, %s97
      %s114 = sphi 0, %s98
    $region4: #{tpu_custom_call.1} parent=1 // loop_header_branch
      %19 = sbr.rel (%p17) target = $region8
    $region5: #{tpu_custom_call.1} parent=1 // loop_body
      %s21 = ssub.s32 %s16, 1
      %s22 = ssub.s32 %s16, 2
      %s23 = sadd.s32 %s16, 1
      %s24 = ssub.s32 %s16, %s23
      %p25 = scmp.eq.s32.totalorder %s24, 0
      %s27 = sadd.s32 %s26, 1
      %s28 = scalar_select %p25, %s26, %s27
      %p31 = pneg %p25
      %p32 = scmp.eq.s32.totalorder %s16, 1
      %p33 = por %p31, %p32
      %p34 = scmp.ne.s32.totalorder %s26, %s29
      %p35 = scmp.eq.s32.totalorder %s16, 0
      %p36 = por %p34, %p35
      %p37 = scmp.ne.s32.totalorder %s26, %s29
      %p38 = scmp.eq.s32.totalorder %s21, 1
      %p39 = por %p37, %p38
      %p40 = scmp.ne.s32.totalorder %s29, %s30
      %p41 = scmp.eq.s32.totalorder %s21, 0
      %p42 = por %p40, %p41
      %p43 = scmp.ne.s32.totalorder %s29, %s30
      %p44 = scmp.eq.s32.totalorder %s22, 1
      %p45 = por %p43, %p44
      %p47 = scmp.ne.s32.totalorder %s30, %s46
      %p48 = scmp.eq.s32.totalorder %s22, 0
      %p49 = por %p47, %p48
      %s51 = sadd.s32 %s50, 1
      %p54 = scmp.eq.s32.totalorder %s16, 1
      %p55 = scmp.ne.s32.totalorder %s50, %s52
      %p56 = scmp.eq.s32.totalorder %s16, 0
      %p57 = por %p55, %p56
      %p58 = scmp.ne.s32.totalorder %s50, %s52
      %p59 = scmp.eq.s32.totalorder %s21, 1
      %p60 = por %p58, %p59
      %p61 = scmp.ne.s32.totalorder %s52, %s53
      %p62 = scmp.eq.s32.totalorder %s21, 0
      %p63 = por %p61, %p62
      %p64 = scmp.ne.s32.totalorder %s52, %s53
      %p65 = scmp.eq.s32.totalorder %s22, 1
      %p66 = por %p64, %p65
      %p68 = scmp.ne.s32.totalorder %s53, %s67
      %p69 = scmp.eq.s32.totalorder %s22, 0
      %p70 = por %p68, %p69
      %s72 = sadd.s32 %s71, 1
      %p75 = scmp.eq.s32.totalorder %s16, 1
      %p76 = scmp.ne.s32.totalorder %s71, %s73
      %p77 = scmp.eq.s32.totalorder %s16, 0
      %p78 = por %p76, %p77
      %p79 = scmp.ne.s32.totalorder %s71, %s73
      %p80 = scmp.eq.s32.totalorder %s21, 1
      %p81 = por %p79, %p80
      %p82 = scmp.ne.s32.totalorder %s73, %s74
      %p83 = scmp.eq.s32.totalorder %s21, 0
      %p84 = por %p82, %p83
      %p85 = scmp.ne.s32.totalorder %s73, %s74
      %p86 = scmp.eq.s32.totalorder %s22, 1
      %p87 = por %p85, %p86
      %p89 = scmp.ne.s32.totalorder %s74, %s88
      %p90 = scmp.eq.s32.totalorder %s22, 0
      %p91 = por %p89, %p90
      %s92 = ssub.s32 %s16, %s23
      %p93 = scmp.eq.s32.totalorder %s92, 0
      %s95 = sadd.s32 %s94, 1
      %s96 = scalar_select %p93, %s94, %s95
      %p99 = pneg %p93
      %p100 = scmp.eq.s32.totalorder %s16, 1
      %p101 = por %p99, %p100
      %p102 = scmp.ne.s32.totalorder %s94, %s97
      %p103 = scmp.eq.s32.totalorder %s16, 0
      %p104 = por %p102, %p103
      %p105 = scmp.ne.s32.totalorder %s94, %s97
      %p106 = scmp.eq.s32.totalorder %s21, 1
      %p107 = por %p105, %p106
      %p108 = scmp.ne.s32.totalorder %s97, %s98
      %p109 = scmp.eq.s32.totalorder %s21, 0
      %p110 = por %p108, %p109
      %p111 = scmp.ne.s32.totalorder %s97, %s98
      %p112 = scmp.eq.s32.totalorder %s22, 1
      %p113 = por %p111, %p112
      %p115 = scmp.ne.s32.totalorder %s98, %s114
      %p116 = scmp.eq.s32.totalorder %s22, 0
      %p117 = por %p115, %p116
      %p118 = scmp.le.s32.totalorder 1, %s16
      %p119 = scmp.lt.s32.totalorder %s16, 3
      %p120 = pnand %p118, %p119
      %p121 = pneg %p120
      // Predicated region
      $region9: #{tpu_custom_call.1} parent=5 // pred_check
        _
      $region10: #{tpu_custom_call.1} parent=5 // pred_check_branch
        %123 = sbr.rel (%p120) target = $region12
      $region11: #{tpu_custom_call.1} parent=5 // pred_region
        %s124 = ssub.s32 %s16, 1
        // Predicated region
        $region13: #{tpu_custom_call.1} parent=11 // pred_check
          %p125 = pneg %p63
        $region14: #{tpu_custom_call.1} parent=11 // pred_check_branch
          %127 = sbr.rel (%p125) target = $region16
        $region15: #{tpu_custom_call.1} parent=11 // pred_region
          %s129 = ssub.s32 512, 512
          %130 = vsyncadd [#allocation6], %s129
          %s131 = sshll.u32 [#allocation5], 4
          %s132 = int_to_ptr.vmem [resolvable:$true] %s131
          %137 = dma.hbm_to_vmem [thread:$0]  %s1, 512, %s132, [#allocation6], 128, 128, 8
        $region16: #{tpu_custom_call.1} parent=11 // pred_fallthru
          _
        // Predicated region
        $region17: #{tpu_custom_call.1} parent=11 // pred_check
          %p138 = pneg %p84
        $region18: #{tpu_custom_call.1} parent=11 // pred_check_branch
          %140 = sbr.rel (%p138) target = $region20
        $region19: #{tpu_custom_call.1} parent=11 // pred_region
          _
        $region20: #{tpu_custom_call.1} parent=11 // pred_fallthru
          _
      $region12: #{tpu_custom_call.1} parent=5 // pred_fallthru
        _
      %p141 = scmp.lt.s32.totalorder %s16, 2
      // Predicated region
      $region21: #{tpu_custom_call.1} parent=5 // pred_check
        %p142 = pneg %p141
      $region22: #{tpu_custom_call.1} parent=5 // pred_check_branch
        %144 = sbr.rel (%p142) target = $region24
      $region23: #{tpu_custom_call.1} parent=5 // pred_region
        // Predicated region
        $region25: #{tpu_custom_call.1} parent=23 // pred_check
          %p145 = pneg %p36
        $region26: #{tpu_custom_call.1} parent=23 // pred_check_branch
          %147 = sbr.rel (%p145) target = $region28
        $region27: #{tpu_custom_call.1} parent=23 // pred_region
          %s148 = sand.u32 %s26, 1
          %s149 = scalar_lea.sflag [#allocation3], %s148
          %s150 = sand.u32 %s26, 1
          %s151 = smul.addr %s150, 8
          %s152 = scalar_lea.vmem [#allocation2], %s151
          %s154 = ssub.s32 128, 128
          %155 = vsyncadd %s149, %s154
          %s156 = smul.addr %s16, 128
          %s157 = scalar_lea.hbm %s0, %s156
          %s159 = sshll.u32 %s152, 4
          %s160 = int_to_ptr.vmem [resolvable:$true] %s159
          %162 = dma.hbm_to_vmem [thread:$0]  %s157, 128, %s160, %s149
        $region28: #{tpu_custom_call.1} parent=23 // pred_fallthru
          _
      $region24: #{tpu_custom_call.1} parent=5 // pred_fallthru
        _
      %p163 = scmp.le.s32.totalorder 1, %s16
      %p164 = scmp.lt.s32.totalorder %s16, 3
      %p165 = pnand %p163, %p164
      %p166 = pneg %p165
      // Predicated region
      $region29: #{tpu_custom_call.1} parent=5 // pred_check
        _
      $region30: #{tpu_custom_call.1} parent=5 // pred_check_branch
        %168 = sbr.rel (%p165) target = $region32
      $region31: #{tpu_custom_call.1} parent=5 // pred_region
        %s169 = ssub.s32 %s16, 1
        %s170 = sand.u32 %s29, 1
        %s171 = scalar_lea.sflag [#allocation3], %s170
        %s172 = sand.u32 %s29, 1
        %s173 = smul.addr %s172, 8
        %s174 = scalar_lea.vmem [#allocation2], %s173
        // Predicated region
        $region33: #{tpu_custom_call.1} parent=31 // pred_check
          %p175 = pneg %p42
        $region34: #{tpu_custom_call.1} parent=31 // pred_check_branch
          %177 = sbr.rel (%p175) target = $region36
        $region35: #{tpu_custom_call.1} parent=31 // pred_region
          %178 = dma.done %s171, 128
        $region36: #{tpu_custom_call.1} parent=31 // pred_fallthru
          _
        // Predicated region
        $region37: #{tpu_custom_call.1} parent=31 // pred_check
          %p179 = pneg %p63
        $region38: #{tpu_custom_call.1} parent=31 // pred_check_branch
          %181 = sbr.rel (%p179) target = $region40
        $region39: #{tpu_custom_call.1} parent=31 // pred_region
          %182 = dma.done [#allocation6], 512
        $region40: #{tpu_custom_call.1} parent=31 // pred_fallthru
          _
        %s183 = sand.u32 %s29, 1
        %s184 = scalar_lea.sflag [#allocation3], %s183
        %s185 = sand.u32 %s29, 1
        %s186 = smul.addr %s185, 8
        %s187 = scalar_lea.vmem [#allocation2], %s186
        %p188 = pneg %p42
        %p189 = pneg %p39
        %p190 = pneg %p63
        %p191 = pneg %p60
        %p192 = pneg %p84
        %p193 = pneg %p81
        %p194 = pneg %p110
        %p195 = pneg %p107
        %s196 = sand.u32 %s97, 1
        %s197 = scalar_lea.sflag [#allocation4], %s196
        %s198 = sand.u32 %s97, 1
        %s199 = smul.addr %s198, 8
        %s200 = scalar_lea.vmem [#allocation7], %s199
        %v201 = vld [vmem:[%s174] sm:$0xff]
        %v202 = vld [vmem:[#allocation5] sm:$0xff]
        %v203 = vld [vmem:[#allocation5 + $0x8] sm:$0xff]
        %v204 = vld [vmem:[#allocation5 + $0x10] sm:$0xff]
        %v205 = vld [vmem:[#allocation5 + $0x18] sm:$0xff]
        %v206 = vld [vmem:[%s2] sm:$0x1]
        %v208 = vlaneseq
        %v209 = vshrl.u32 %v208, 7
        %v210 = vsub.s32 0, %v209
        %v211 = vrot.slane %v206, %v210
        %vm213 = vcmask 261120
        %v215 = vsel %vm213, %v201, 0
        %217 = vmatprep.subr.mxu0 0.0
        %218 = vmatpush1.msra.mxu0 %v202
        %219 = vmatprep.subr.mxu0 0.0
        %220 = vmatpush1.msra.mxu0 %v203
        %221 = vmatprep.subr.mxu0 0.0
        %222 = vmatpush1.msra.mxu0 %v204
        %223 = vmatprep.subr.mxu0 0.0
        %224 = vmatpush1.msra.mxu0 %v205
        %225 = vmatprep.subr.mxu0 0.0
        %226 = vmatpush1.msra.mxu0 0.0
        %227 = vmatprep.subr.mxu0 0.0
        %228 = vmatpush1.msra.mxu0 0.0
        %229 = vmatprep.subr.mxu0 0.0
        %230 = vmatpush1.msra.mxu0 0.0
        %231 = vmatprep.subr.mxu0 0.0
        %232 = vmatpush1.msra.mxu0 0.0
        %233 = vmatprep.subr.mxu0 0.0
        %234 = vmatpush1.msra.mxu0 0.0
        %235 = vmatprep.subr.mxu0 0.0
        %236 = vmatpush1.msra.mxu0 0.0
        %237 = vmatprep.subr.mxu0 0.0
        %238 = vmatpush1.msra.mxu0 0.0
        %239 = vmatprep.subr.mxu0 0.0
        %240 = vmatpush1.msra.mxu0 0.0
        %241 = vmatprep.subr.mxu0 0.0
        %242 = vmatpush1.msra.mxu0 0.0
        %243 = vmatprep.subr.mxu0 0.0
        %244 = vmatpush1.msra.mxu0 0.0
        %245 = vmatprep.subr.mxu0 0.0
        %246 = vmatpush1.msra.mxu0 0.0
        %247 = vmatprep.subr.mxu0 0.0
        %248 = vmatpush1.msra.mxu0 0.0
        %249 = vmatprep.subr.mxu0 0.0
        %250 = vmatpush1.msra.mxu0 0.0
        %251 = vmatprep.subr.mxu0 0.0
        %252 = vmatpush1.msra.mxu0 0.0
        %253 = vmatprep.subr.mxu0 0.0
        %254 = vmatpush1.msra.mxu0 0.0
        %255 = vmatprep.subr.mxu0 0.0
        %256 = vmatpush1.msra.mxu0 0.0
        %257 = vmatprep.subr.mxu0 0.0
        %258 = vmatpush1.msra.mxu0 0.0
        %259 = vmatprep.subr.mxu0 0.0
        %260 = vmatpush1.msra.mxu0 0.0
        %261 = vmatprep.subr.mxu0 0.0
        %262 = vmatpush1.msra.mxu0 0.0
        %263 = vmatprep.subr.mxu0 0.0
        %264 = vmatpush1.msra.mxu0 0.0
        %265 = vmatprep.subr.mxu0 0.0
        %266 = vmatpush1.msra.mxu0 0.0
        %267 = vmatprep.subr.mxu0 0.0
        %268 = vmatpush1.msra.mxu0 0.0
        %269 = vmatprep.subr.mxu0 0.0
        %270 = vmatpush1.msra.mxu0 0.0
        %271 = vmatprep.subr.mxu0 0.0
        %272 = vmatpush1.msra.mxu0 0.0
        %273 = vmatprep.subr.mxu0 0.0
        %274 = vmatpush1.msra.mxu0 0.0
        %275 = vmatprep.subr.mxu0 0.0
        %276 = vmatpush1.msra.mxu0 0.0
        %277 = vmatprep.subr.mxu0 0.0
        %278 = vmatpush1.msra.mxu0 0.0
        %279 = vmatprep.subr.mxu0 0.0
        %280 = vmatpush1.msra.mxu0 0.0
        %281 = vmatprep.mubr.f32.mxu0 0.0
        %282 = vmatmul.mubr.f32.gmra.mrb[0].mxu0 %v215
        %v283 = vpop.f32.mrb[0].mxu0
        %v284 = vadd.f32 %v211, %v283
        %v285 = vpop.f32.mrb[0].mxu0
        %286 = vdwg.mxu0
        %287 = vmax.xlane.f32.xlu0 %v284
        %v288 = vpop.xlane.xlu0 %287
        %v289 = vsub.f32 %v284, %v288
        %v290 = vmul.f32 %v289, 1.442695
        %v291 = vpow.pop %v290
        %292 = vadd.xlane.f32.xlu0 %v291
        %v293 = vpop.xlane.xlu0 %292
        %v294 = vlog2.pop %v293
        %v295 = vmul.f32 %v294, 0.6931472
        %v296 = vsub.f32 %v289, %v295
        %297 = vst [vmem:[%s200] sm:$0xff] %v296
        %s298 = sand.u32 %s97, 1
        %s299 = scalar_lea.sflag [#allocation4], %s298
        %s300 = sand.u32 %s97, 1
        %s301 = smul.addr %s300, 8
        %s302 = scalar_lea.vmem [#allocation7], %s301
        // Predicated region
        $region41: #{tpu_custom_call.1} parent=31 // pred_check
          %p303 = pneg %p107
        $region42: #{tpu_custom_call.1} parent=31 // pred_check_branch
          %305 = sbr.rel (%p303) target = $region44
        $region43: #{tpu_custom_call.1} parent=31 // pred_region
          %s307 = ssub.s32 128, 128
          %308 = vsyncadd %s299, %s307
          %s309 = smul.addr %s21, 128
          %s310 = scalar_lea.hbm %s3, %s309
          %s312 = sshll.u32 %s302, 4
          %s313 = int_to_ptr.vmem [resolvable:$true] %s312
          %315 = dma.vmem_to_hbm [thread:$0]  %s313, 128, %s310, %s299
        $region44: #{tpu_custom_call.1} parent=31 // pred_fallthru
          _
      $region32: #{tpu_custom_call.1} parent=5 // pred_fallthru
        _
      %p316 = scmp.le.s32.totalorder 2, %s16
      // Predicated region
      $region45: #{tpu_custom_call.1} parent=5 // pred_check
        %p317 = pneg %p316
      $region46: #{tpu_custom_call.1} parent=5 // pred_check_branch
        %319 = sbr.rel (%p317) target = $region48
      $region47: #{tpu_custom_call.1} parent=5 // pred_region
        %s320 = ssub.s32 %s16, 2
        // Predicated region
        $region49: #{tpu_custom_call.1} parent=47 // pred_check
          %p321 = pneg %p113
        $region50: #{tpu_custom_call.1} parent=47 // pred_check_branch
          %323 = sbr.rel (%p321) target = $region52
        $region51: #{tpu_custom_call.1} parent=47 // pred_region
          %s324 = sand.u32 %s98, 1
          %s325 = scalar_lea.sflag [#allocation4], %s324
          %s326 = sand.u32 %s98, 1
          %s327 = smul.addr %s326, 8
          %s328 = scalar_lea.vmem [#allocation7], %s327
          %329 = dma.done %s325, 128
        $region52: #{tpu_custom_call.1} parent=47 // pred_fallthru
          _
      $region48: #{tpu_custom_call.1} parent=5 // pred_fallthru
        _
    $region6: #{tpu_custom_call.1} parent=1 // loop_footer
      %s20 = sadd.s32 1, %s16
    $region7: #{tpu_custom_call.1} parent=1 // loop_footer_branch
      %15 = sbr.rel target = $region3
    $region8: #{tpu_custom_call.1} parent=1 // loop_exit
      _
    %330 = vsyncpa [#allocation3], 1
    %s331 = scalar_lea.sflag [#allocation3], 1
    %332 = vsyncpa %s331, 1
    %333 = vsyncpa [#allocation6], 1
    %334 = vsyncpa [#allocation4], 1
    %s335 = scalar_lea.sflag [#allocation4], 1
    %336 = vsyncpa %s335, 1

// kernel: tpu_custom_call.1
$region0: #{tpu_custom_call.1}
  #allocation0 [shape = 'u32[]', space=smem, size = 0x4, offset = 0x4, fixed_abs, tag = 'smem constant byte address 0x4 - core index']
  #allocation1 [shape = 'u32[144,128]{1,0:T(1,128)}', space=vmem, size = 0x12000, scoped, tag = 'internal scratch']
  %s0 = inlined_call_operand.hbm [shape: f32[16,32], index: 0, kind: input, shape index: {}]
  %s1 = inlined_call_operand.hbm [shape: f32[32,128], index: 1, kind: input, shape index: {}]
  %s2 = inlined_call_operand.vmem [shape: f32[1,128], index: 2, kind: input, shape index: {}]
  %s3 = inlined_call_operand.hbm [shape: f32[16,128], index: 3, kind: output, shape index: {}]
  %s4 = sld [smem:[#allocation0]]
  $region53: #{tpu_custom_call.1} parent=0
    _
  %s6 = ssub.s32 1, %s4
  %s7 = scalar_select 0, %s6, %s4
  $region1: #{tpu_custom_call.1} parent=0
    #allocation2 [shape = 'u8[8192]{0}', space=vmem, size = 0x2000, scoped, tag = 'input window, operand 0']
    #allocation3 [shape = 's32[2]{0}', space=sflag, size = 0x8, scoped, tag = 'scoped memory for tpu_custom_call.1']
    #allocation4 [shape = 's32[2]{0}', space=sflag, size = 0x8, scoped, tag = 'scoped memory for tpu_custom_call.1']
    #allocation5 [shape = 'u8[16384]{0}', space=vmem, size = 0x4000, scoped, tag = 'input window, operand 1, single buffered']
    #allocation6 [shape = 's32[1]{0}', space=sflag, size = 0x4, scoped, tag = 'scoped memory for tpu_custom_call.1']
    #allocation7 [shape = 'u8[8192]{0}', space=vmem, size = 0x2000, scoped, tag = 'output window, operand 0']
    %8 = vsyncpa [#allocation3], 0
    %s9 = scalar_lea.sflag [#allocation3], 1
    %10 = vsyncpa %s9, 0
    %11 = vsyncpa [#allocation6], 0
    %12 = vsyncpa [#allocation4], 0
    %s13 = scalar_lea.sflag [#allocation4], 1
    %14 = vsyncpa %s13, 0
    loop: start=0, step=1, limit=4
    $region2: #{tpu_custom_call.1} parent=1 // loop_pre_header
      _
    $region3: #{tpu_custom_call.1} parent=1 // loop_header
      %s16 = sphi 0, %s20
      %p17 = scmp.ge.s32.totalorder %s16, 4
      %s26 = sphi 0, %s28
      %s29 = sphi 0, %s26
      %s30 = sphi 0, %s29
      %s46 = sphi 0, %s30
      %s50 = sphi 0, %s50
      %s52 = sphi 0, %s50
      %s53 = sphi 0, %s52
      %s67 = sphi 0, %s53
      %s71 = sphi 0, %s71
      %s73 = sphi 0, %s71
      %s74 = sphi 0, %s73
      %s88 = sphi 0, %s74
      %s94 = sphi 0, %s96
      %s97 = sphi 0, %s94
      %s98 = sphi 0, %s97
      %s114 = sphi 0, %s98
    $region4: #{tpu_custom_call.1} parent=1 // loop_header_branch
      %19 = sbr.rel (%p17) target = $region8
    $region5: #{tpu_custom_call.1} parent=1 // loop_body
      %s21 = ssub.s32 %s16, 1
      %s22 = ssub.s32 %s16, 2
      %s23 = sadd.s32 %s16, 1
      %s24 = ssub.s32 %s16, %s23
      %p25 = scmp.eq.s32.totalorder %s24, 0
      %s27 = sadd.s32 %s26, 1
      %s28 = scalar_select %p25, %s26, %s27
      %p31 = pneg %p25
      %p32 = scmp.eq.s32.totalorder %s16, 1
      %p33 = por %p31, %p32
      %p34 = scmp.ne.s32.totalorder %s26, %s29
      %p35 = scmp.eq.s32.totalorder %s16, 0
      %p36 = por %p34, %p35
      %p37 = scmp.ne.s32.totalorder %s26, %s29
      %p38 = scmp.eq.s32.totalorder %s21, 1
      %p39 = por %p37, %p38
      %p40 = scmp.ne.s32.totalorder %s29, %s30
      %p41 = scmp.eq.s32.totalorder %s21, 0
      %p42 = por %p40, %p41
      %p43 = scmp.ne.s32.totalorder %s29, %s30
      %p44 = scmp.eq.s32.totalorder %s22, 1
      %p45 = por %p43, %p44
      %p47 = scmp.ne.s32.totalorder %s30, %s46
      %p48 = scmp.eq.s32.totalorder %s22, 0
      %p49 = por %p47, %p48
      %s51 = sadd.s32 %s50, 1
      %p54 = scmp.eq.s32.totalorder %s16, 1
      %p55 = scmp.ne.s32.totalorder %s50, %s52
      %p56 = scmp.eq.s32.totalorder %s16, 0
      %p57 = por %p55, %p56
      %p58 = scmp.ne.s32.totalorder %s50, %s52
      %p59 = scmp.eq.s32.totalorder %s21, 1
      %p60 = por %p58, %p59
      %p61 = scmp.ne.s32.totalorder %s52, %s53
      %p62 = scmp.eq.s32.totalorder %s21, 0
      %p63 = por %p61, %p62
      %p64 = scmp.ne.s32.totalorder %s52, %s53
      %p65 = scmp.eq.s32.totalorder %s22, 1
      %p66 = por %p64, %p65
      %p68 = scmp.ne.s32.totalorder %s53, %s67
      %p69 = scmp.eq.s32.totalorder %s22, 0
      %p70 = por %p68, %p69
      %s72 = sadd.s32 %s71, 1
      %p75 = scmp.eq.s32.totalorder %s16, 1
      %p76 = scmp.ne.s32.totalorder %s71, %s73
      %p77 = scmp.eq.s32.totalorder %s16, 0
      %p78 = por %p76, %p77
      %p79 = scmp.ne.s32.totalorder %s71, %s73
      %p80 = scmp.eq.s32.totalorder %s21, 1
      %p81 = por %p79, %p80
      %p82 = scmp.ne.s32.totalorder %s73, %s74
      %p83 = scmp.eq.s32.totalorder %s21, 0
      %p84 = por %p82, %p83
      %p85 = scmp.ne.s32.totalorder %s73, %s74
      %p86 = scmp.eq.s32.totalorder %s22, 1
      %p87 = por %p85, %p86
      %p89 = scmp.ne.s32.totalorder %s74, %s88
      %p90 = scmp.eq.s32.totalorder %s22, 0
      %p91 = por %p89, %p90
      %s92 = ssub.s32 %s16, %s23
      %p93 = scmp.eq.s32.totalorder %s92, 0
      %s95 = sadd.s32 %s94, 1
      %s96 = scalar_select %p93, %s94, %s95
      %p99 = pneg %p93
      %p100 = scmp.eq.s32.totalorder %s16, 1
      %p101 = por %p99, %p100
      %p102 = scmp.ne.s32.totalorder %s94, %s97
      %p103 = scmp.eq.s32.totalorder %s16, 0
      %p104 = por %p102, %p103
      %p105 = scmp.ne.s32.totalorder %s94, %s97
      %p106 = scmp.eq.s32.totalorder %s21, 1
      %p107 = por %p105, %p106
      %p108 = scmp.ne.s32.totalorder %s97, %s98
      %p109 = scmp.eq.s32.totalorder %s21, 0
      %p110 = por %p108, %p109
      %p111 = scmp.ne.s32.totalorder %s97, %s98
      %p112 = scmp.eq.s32.totalorder %s22, 1
      %p113 = por %p111, %p112
      %p115 = scmp.ne.s32.totalorder %s98, %s114
      %p116 = scmp.eq.s32.totalorder %s22, 0
      %p117 = por %p115, %p116
      %p118 = scmp.le.s32.totalorder 1, %s16
      %p119 = scmp.lt.s32.totalorder %s16, 3
      %p120 = pnand %p118, %p119
      %p121 = pneg %p120
      // Predicated region
      $region9: #{tpu_custom_call.1} parent=5 // pred_check
        _
      $region10: #{tpu_custom_call.1} parent=5 // pred_check_branch
        %123 = sbr.rel (%p120) target = $region12
      $region11: #{tpu_custom_call.1} parent=5 // pred_region
        %s124 = ssub.s32 %s16, 1
        // Predicated region
        $region13: #{tpu_custom_call.1} parent=11 // pred_check
          %p125 = pneg %p63
        $region14: #{tpu_custom_call.1} parent=11 // pred_check_branch
          %127 = sbr.rel (%p125) target = $region16
        $region15: #{tpu_custom_call.1} parent=11 // pred_region
          %s129 = ssub.s32 512, 512
          %130 = vsyncadd [#allocation6], %s129
          %s131 = sshll.u32 [#allocation5], 4
          %s132 = int_to_ptr.vmem [resolvable:$true] %s131
          %137 = dma.hbm_to_vmem [thread:$0]  %s1, 512, %s132, [#allocation6], 128, 128, 8
        $region16: #{tpu_custom_call.1} parent=11 // pred_fallthru
          _
        // Predicated region
        $region17: #{tpu_custom_call.1} parent=11 // pred_check
          %p138 = pneg %p84
        $region18: #{tpu_custom_call.1} parent=11 // pred_check_branch
          %140 = sbr.rel (%p138) target = $region20
        $region19: #{tpu_custom_call.1} parent=11 // pred_region
          _
        $region20: #{tpu_custom_call.1} parent=11 // pred_fallthru
          _
      $region12: #{tpu_custom_call.1} parent=5 // pred_fallthru
        _
      %p141 = scmp.lt.s32.totalorder %s16, 2
      // Predicated region
      $region21: #{tpu_custom_call.1} parent=5 // pred_check
        %p142 = pneg %p141
      $region22: #{tpu_custom_call.1} parent=5 // pred_check_branch
        %144 = sbr.rel (%p142) target = $region24
      $region23: #{tpu_custom_call.1} parent=5 // pred_region
        // Predicated region
        $region25: #{tpu_custom_call.1} parent=23 // pred_check
          %p145 = pneg %p36
        $region26: #{tpu_custom_call.1} parent=23 // pred_check_branch
          %147 = sbr.rel (%p145) target = $region28
        $region27: #{tpu_custom_call.1} parent=23 // pred_region
          %s148 = sand.u32 %s26, 1
          %s149 = scalar_lea.sflag [#allocation3], %s148
          %s150 = sand.u32 %s26, 1
          %s151 = smul.addr %s150, 8
          %s152 = scalar_lea.vmem [#allocation2], %s151
          %s154 = ssub.s32 128, 128
          %155 = vsyncadd %s149, %s154
          %s156 = smul.addr %s16, 128
          %s157 = scalar_lea.hbm %s0, %s156
          %s159 = sshll.u32 %s152, 4
          %s160 = int_to_ptr.vmem [resolvable:$true] %s159
          %162 = dma.hbm_to_vmem [thread:$0]  %s157, 128, %s160, %s149
        $region28: #{tpu_custom_call.1} parent=23 // pred_fallthru
          _
      $region24: #{tpu_custom_call.1} parent=5 // pred_fallthru
        _
      %p163 = scmp.le.s32.totalorder 1, %s16
      %p164 = scmp.lt.s32.totalorder %s16, 3
      %p165 = pnand %p163, %p164
      %p166 = pneg %p165
      // Predicated region
      $region29: #{tpu_custom_call.1} parent=5 // pred_check
        _
      $region30: #{tpu_custom_call.1} parent=5 // pred_check_branch
        %168 = sbr.rel (%p165) target = $region32
      $region31: #{tpu_custom_call.1} parent=5 // pred_region
        %s169 = ssub.s32 %s16, 1
        %s170 = sand.u32 %s29, 1
        %s171 = scalar_lea.sflag [#allocation3], %s170
        %s172 = sand.u32 %s29, 1
        %s173 = smul.addr %s172, 8
        %s174 = scalar_lea.vmem [#allocation2], %s173
        // Predicated region
        $region33: #{tpu_custom_call.1} parent=31 // pred_check
          %p175 = pneg %p42
        $region34: #{tpu_custom_call.1} parent=31 // pred_check_branch
          %177 = sbr.rel (%p175) target = $region36
        $region35: #{tpu_custom_call.1} parent=31 // pred_region
          %178 = dma.done %s171, 128
        $region36: #{tpu_custom_call.1} parent=31 // pred_fallthru
          _
        // Predicated region
        $region37: #{tpu_custom_call.1} parent=31 // pred_check
          %p179 = pneg %p63
        $region38: #{tpu_custom_call.1} parent=31 // pred_check_branch
          %181 = sbr.rel (%p179) target = $region40
        $region39: #{tpu_custom_call.1} parent=31 // pred_region
          %182 = dma.done [#allocation6], 512
        $region40: #{tpu_custom_call.1} parent=31 // pred_fallthru
          _
        %s183 = sand.u32 %s29, 1
        %s184 = scalar_lea.sflag [#allocation3], %s183
        %s185 = sand.u32 %s29, 1
        %s186 = smul.addr %s185, 8
        %s187 = scalar_lea.vmem [#allocation2], %s186
        %p188 = pneg %p42
        %p189 = pneg %p39
        %p190 = pneg %p63
        %p191 = pneg %p60
        %p192 = pneg %p84
        %p193 = pneg %p81
        %p194 = pneg %p110
        %p195 = pneg %p107
        %s196 = sand.u32 %s97, 1
        %s197 = scalar_lea.sflag [#allocation4], %s196
        %s198 = sand.u32 %s97, 1
        %s199 = smul.addr %s198, 8
        %s200 = scalar_lea.vmem [#allocation7], %s199
        %v201 = vld [vmem:[%s174] sm:$0xff]
        %v202 = vld [vmem:[#allocation5] sm:$0xff]
        %v203 = vld [vmem:[#allocation5 + $0x8] sm:$0xff]
        %v204 = vld [vmem:[#allocation5 + $0x10] sm:$0xff]
        %v205 = vld [vmem:[#allocation5 + $0x18] sm:$0xff]
        %v206 = vld [vmem:[%s2] sm:$0x1]
        %v208 = vlaneseq
        %v209 = vshrl.u32 %v208, 7
        %v210 = vsub.s32 0, %v209
        %v211 = vrot.slane %v206, %v210
        %vm213 = vcmask 261120
        %v215 = vsel %vm213, %v201, 0
        %217 = vmatprep.subr.mxu0 0.0
        %218 = vmatpush1.msra.mxu0 %v202
        %219 = vmatprep.subr.mxu0 0.0
        %220 = vmatpush1.msra.mxu0 %v203
        %221 = vmatprep.subr.mxu0 0.0
        %222 = vmatpush1.msra.mxu0 %v204
        %223 = vmatprep.subr.mxu0 0.0
        %224 = vmatpush1.msra.mxu0 %v205
        %225 = vmatprep.subr.mxu0 0.0
        %226 = vmatpush1.msra.mxu0 0.0
        %227 = vmatprep.subr.mxu0 0.0
        %228 = vmatpush1.msra.mxu0 0.0
        %229 = vmatprep.subr.mxu0 0.0
        %230 = vmatpush1.msra.mxu0 0.0
        %231 = vmatprep.subr.mxu0 0.0
        %232 = vmatpush1.msra.mxu0 0.0
        %233 = vmatprep.subr.mxu0 0.0
        %234 = vmatpush1.msra.mxu0 0.0
        %235 = vmatprep.subr.mxu0 0.0
        %236 = vmatpush1.msra.mxu0 0.0
        %237 = vmatprep.subr.mxu0 0.0
        %238 = vmatpush1.msra.mxu0 0.0
        %239 = vmatprep.subr.mxu0 0.0
        %240 = vmatpush1.msra.mxu0 0.0
        %241 = vmatprep.subr.mxu0 0.0
        %242 = vmatpush1.msra.mxu0 0.0
        %243 = vmatprep.subr.mxu0 0.0
        %244 = vmatpush1.msra.mxu0 0.0
        %245 = vmatprep.subr.mxu0 0.0
        %246 = vmatpush1.msra.mxu0 0.0
        %247 = vmatprep.subr.mxu0 0.0
        %248 = vmatpush1.msra.mxu0 0.0
        %249 = vmatprep.subr.mxu0 0.0
        %250 = vmatpush1.msra.mxu0 0.0
        %251 = vmatprep.subr.mxu0 0.0
        %252 = vmatpush1.msra.mxu0 0.0
        %253 = vmatprep.subr.mxu0 0.0
        %254 = vmatpush1.msra.mxu0 0.0
        %255 = vmatprep.subr.mxu0 0.0
        %256 = vmatpush1.msra.mxu0 0.0
        %257 = vmatprep.subr.mxu0 0.0
        %258 = vmatpush1.msra.mxu0 0.0
        %259 = vmatprep.subr.mxu0 0.0
        %260 = vmatpush1.msra.mxu0 0.0
        %261 = vmatprep.subr.mxu0 0.0
        %262 = vmatpush1.msra.mxu0 0.0
        %263 = vmatprep.subr.mxu0 0.0
        %264 = vmatpush1.msra.mxu0 0.0
        %265 = vmatprep.subr.mxu0 0.0
        %266 = vmatpush1.msra.mxu0 0.0
        %267 = vmatprep.subr.mxu0 0.0
        %268 = vmatpush1.msra.mxu0 0.0
        %269 = vmatprep.subr.mxu0 0.0
        %270 = vmatpush1.msra.mxu0 0.0
        %271 = vmatprep.subr.mxu0 0.0
        %272 = vmatpush1.msra.mxu0 0.0
        %273 = vmatprep.subr.mxu0 0.0
        %274 = vmatpush1.msra.mxu0 0.0
        %275 = vmatprep.subr.mxu0 0.0
        %276 = vmatpush1.msra.mxu0 0.0
        %277 = vmatprep.subr.mxu0 0.0
        %278 = vmatpush1.msra.mxu0 0.0
        %279 = vmatprep.subr.mxu0 0.0
        %280 = vmatpush1.msra.mxu0 0.0
        %281 = vmatprep.mubr.f32.mxu0 0.0
        %282 = vmatmul.mubr.f32.gmra.mrb[0].mxu0 %v215
        %v283 = vpop.f32.mrb[0].mxu0
        %v284 = vadd.f32 %v211, %v283
        %v285 = vpop.f32.mrb[0].mxu0
        %286 = vdwg.mxu0
        %287 = vmax.xlane.f32.xlu0 %v284
        %v288 = vpop.xlane.xlu0 %287
        %v289 = vsub.f32 %v284, %v288
        %v290 = vmul.f32 %v289, 1.442695
        %v291 = vpow.pop %v290
        %292 = vadd.xlane.f32.xlu0 %v291
        %v293 = vpop.xlane.xlu0 %292
        %v294 = vlog2.pop %v293
        %v295 = vmul.f32 %v294, 0.6931472
        %v296 = vsub.f32 %v289, %v295
        %297 = vst [vmem:[%s200] sm:$0xff] %v296
        %s298 = sand.u32 %s97, 1
        %s299 = scalar_lea.sflag [#allocation4], %s298
        %s300 = sand.u32 %s97, 1
        %s301 = smul.addr %s300, 8
        %s302 = scalar_lea.vmem [#allocation7], %s301
        // Predicated region
        $region41: #{tpu_custom_call.1} parent=31 // pred_check
          %p303 = pneg %p107
        $region42: #{tpu_custom_call.1} parent=31 // pred_check_branch
          %305 = sbr.rel (%p303) target = $region44
        $region43: #{tpu_custom_call.1} parent=31 // pred_region
          %s307 = ssub.s32 128, 128
          %308 = vsyncadd %s299, %s307
          %s309 = smul.addr %s21, 128
          %s310 = scalar_lea.hbm %s3, %s309
          %s312 = sshll.u32 %s302, 4
          %s313 = int_to_ptr.vmem [resolvable:$true] %s312
          %315 = dma.vmem_to_hbm [thread:$0]  %s313, 128, %s310, %s299
        $region44: #{tpu_custom_call.1} parent=31 // pred_fallthru
          _
      $region32: #{tpu_custom_call.1} parent=5 // pred_fallthru
        _
      %p316 = scmp.le.s32.totalorder 2, %s16
      // Predicated region
      $region45: #{tpu_custom_call.1} parent=5 // pred_check
        %p317 = pneg %p316
      $region46: #{tpu_custom_call.1} parent=5 // pred_check_branch
        %319 = sbr.rel (%p317) target = $region48
      $region47: #{tpu_custom_call.1} parent=5 // pred_region
        %s320 = ssub.s32 %s16, 2
        // Predicated region
        $region49: #{tpu_custom_call.1} parent=47 // pred_check
          %p321 = pneg %p113
        $region50: #{tpu_custom_call.1} parent=47 // pred_check_branch
          %323 = sbr.rel (%p321) target = $region52
        $region51: #{tpu_custom_call.1} parent=47 // pred_region
          %s324 = sand.u32 %s98, 1
          %s325 = scalar_lea.sflag [#allocation4], %s324
          %s326 = sand.u32 %s98, 1
          %s327 = smul.addr %s326, 8
          %s328 = scalar_lea.vmem [#allocation7], %s327
          %329 = dma.done %s325, 128
        $region52: #{tpu_custom_call.1} parent=47 // pred_fallthru
          _
      $region48: #{tpu_custom_call.1} parent=5 // pred_fallthru
        _
    $region6: #{tpu_custom_call.1} parent=1 // loop_footer
      %s20 = sadd.s32 1, %s16
    $region7: #{tpu_custom_call.1} parent=1 // loop_footer_branch
      %15 = sbr.rel target = $region3
    $region8: #{tpu_custom_call.1} parent=1 // loop_exit
      _
    %330 = vsyncpa [#allocation3], 1
    %s331 = scalar_lea.sflag [#allocation3], 1
    %332 = vsyncpa %s331, 1
    %333 = vsyncpa [#allocation6], 1
    %334 = vsyncpa [#allocation4], 1
    %s335 = scalar_lea.sflag [#allocation4], 1
    %336 = vsyncpa %s335, 1

// kernel: tpu_custom_call.1
$region0: #{tpu_custom_call.1}
  #allocation0 [shape = 'u32[]', space=smem, size = 0x4, offset = 0x4, fixed_abs, tag = 'smem constant byte address 0x4 - core index']
  #allocation1 [shape = 'u32[144,128]{1,0:T(1,128)}', space=vmem, size = 0x12000, scoped, tag = 'internal scratch']
  #allocation2 [shape = 'f32[8,1]{1,0:T(8,128)}', space=vmem, size = 0x1000, scoped, tag = 'scratch operand']
  #allocation3 [shape = 'f32[8,1]{1,0:T(8,128)}', space=vmem, size = 0x1000, scoped, tag = 'scratch operand']
  %s0 = inlined_call_operand.hbm [shape: f32[16,32], index: 0, kind: input, shape index: {}]
  %s1 = inlined_call_operand.hbm [shape: f32[32,128], index: 1, kind: input, shape index: {}]
  %s2 = inlined_call_operand.vmem [shape: f32[1,128], index: 2, kind: input, shape index: {}]
  %s3 = inlined_call_operand.hbm [shape: f32[16,128], index: 3, kind: output, shape index: {0}]
  %s4 = inlined_call_operand.vmem [shape: f32[16,1], index: 4, kind: output, shape index: {1}]
  %5 = xla_tuple %s3, %s4
  %s6 = sld [smem:[#allocation0]]
  $region69: #{tpu_custom_call.1} parent=0
    _
  %s8 = ssub.s32 1, %s6
  %s9 = scalar_select 0, %s8, %s6
  $region1: #{tpu_custom_call.1} parent=0
    #allocation4 [shape = 'u8[8192]{0}', space=vmem, size = 0x2000, scoped, tag = 'input window, operand 0']
    #allocation5 [shape = 's32[2]{0}', space=sflag, size = 0x8, scoped, tag = 'scoped memory for tpu_custom_call.1']
    #allocation6 [shape = 's32[2]{0}', space=sflag, size = 0x8, scoped, tag = 'scoped memory for tpu_custom_call.1']
    #allocation7 [shape = 'u8[16384]{0}', space=vmem, size = 0x4000, scoped, tag = 'input window, operand 1, single buffered']
    #allocation8 [shape = 's32[1]{0}', space=sflag, size = 0x4, scoped, tag = 'scoped memory for tpu_custom_call.1']
    #allocation9 [shape = 'u8[8192]{0}', space=vmem, size = 0x2000, scoped, tag = 'output window, operand 0']
    %10 = vsyncpa [#allocation5], 0
    %s11 = scalar_lea.sflag [#allocation5], 1
    %12 = vsyncpa %s11, 0
    %13 = vsyncpa [#allocation8], 0
    %14 = vsyncpa [#allocation6], 0
    %s15 = scalar_lea.sflag [#allocation6], 1
    %16 = vsyncpa %s15, 0
    loop: start=0, step=1, limit=4
    $region2: #{tpu_custom_call.1} parent=1 // loop_pre_header
      _
    $region3: #{tpu_custom_call.1} parent=1 // loop_header
      %s18 = sphi 0, %s22
      %p19 = scmp.ge.s32.totalorder %s18, 4
      %s25 = sphi 0, %s37
      %s26 = sphi 0, %s33
      %s27 = sphi 0, %s25
      %s28 = sphi 0, %s26
      %s29 = sphi 0, %s27
      %s30 = sphi 0, %s28
      %s40 = sphi 0, %s42
      %s43 = sphi 0, %s40
      %s44 = sphi 0, %s43
      %s60 = sphi 0, %s44
      %s66 = sphi 0, %s68
      %s69 = sphi 0, %s66
      %s70 = sphi 0, %s69
      %s86 = sphi 0, %s70
      %s92 = sphi 0, %s94
      %s95 = sphi 0, %s92
      %s96 = sphi 0, %s95
      %s112 = sphi 0, %s96
      %s120 = sphi 0, %s122
      %s123 = sphi 0, %s120
      %s124 = sphi 0, %s123
      %s140 = sphi 0, %s124
      %s146 = sphi 0, %s148
      %s149 = sphi 0, %s146
      %s150 = sphi 0, %s149
      %s166 = sphi 0, %s150
    $region4: #{tpu_custom_call.1} parent=1 // loop_header_branch
      %21 = sbr.rel (%p19) target = $region8
    $region5: #{tpu_custom_call.1} parent=1 // loop_body
      %s23 = ssub.s32 %s18, 1
      %s24 = ssub.s32 %s18, 2
      %s31 = sadd.s32 1, %s26
      %p32 = scmp.ge.s32.totalorder %s31, 1
      %s33 = scalar_select %p32, 0, %s31
      %s34 = sadd.s32 1, %s25
      %s35 = scalar_select %p32, %s34, %s25
      %p36 = scmp.ge.s32.totalorder %s35, 2
      %s37 = scalar_select %p36, 0, %s35
      %s38 = ssub.s32 %s25, %s37
      %p39 = scmp.eq.s32.totalorder %s38, 0
      %s41 = sadd.s32 %s40, 1
      %s42 = scalar_select %p39, %s40, %s41
      %p45 = pneg %p39
      %p46 = scmp.eq.s32.totalorder %s18, 1
      %p47 = por %p45, %p46
      %p48 = scmp.ne.s32.totalorder %s40, %s43
      %p49 = scmp.eq.s32.totalorder %s18, 0
      %p50 = por %p48, %p49
      %p51 = scmp.ne.s32.totalorder %s40, %s43
      %p52 = scmp.eq.s32.totalorder %s23, 1
      %p53 = por %p51, %p52
      %p54 = scmp.ne.s32.totalorder %s43, %s44
      %p55 = scmp.eq.s32.totalorder %s23, 0
      %p56 = por %p54, %p55
      %p57 = scmp.ne.s32.totalorder %s43, %s44
      %p58 = scmp.eq.s32.totalorder %s24, 1
      %p59 = por %p57, %p58
      %p61 = scmp.ne.s32.totalorder %s44, %s60
      %p62 = scmp.eq.s32.totalorder %s24, 0
      %p63 = por %p61, %p62
      %s64 = ssub.s32 %s26, %s33
      %p65 = scmp.eq.s32.totalorder %s64, 0
      %s67 = sadd.s32 %s66, 1
      %s68 = scalar_select %p65, %s66, %s67
      %p71 = pneg %p65
      %p72 = scmp.eq.s32.totalorder %s18, 1
      %p73 = por %p71, %p72
      %p74 = scmp.ne.s32.totalorder %s66, %s69
      %p75 = scmp.eq.s32.totalorder %s18, 0
      %p76 = por %p74, %p75
      %p77 = scmp.ne.s32.totalorder %s66, %s69
      %p78 = scmp.eq.s32.totalorder %s23, 1
      %p79 = por %p77, %p78
      %p80 = scmp.ne.s32.totalorder %s69, %s70
      %p81 = scmp.eq.s32.totalorder %s23, 0
      %p82 = por %p80, %p81
      %p83 = scmp.ne.s32.totalorder %s69, %s70
      %p84 = scmp.eq.s32.totalorder %s24, 1
      %p85 = por %p83, %p84
      %p87 = scmp.ne.s32.totalorder %s70, %s86
      %p88 = scmp.eq.s32.totalorder %s24, 0
      %p89 = por %p87, %p88
      %s90 = ssub.s32 %s26, %s33
      %p91 = scmp.eq.s32.totalorder %s90, 0
      %s93 = sadd.s32 %s92, 1
      %s94 = scalar_select %p91, %s92, %s93
      %p97 = pneg %p91
      %p98 = scmp.eq.s32.totalorder %s18, 1
      %p99 = por %p97, %p98
      %p100 = scmp.ne.s32.totalorder %s92, %s95
      %p101 = scmp.eq.s32.totalorder %s18, 0
      %p102 = por %p100, %p101
      %p103 = scmp.ne.s32.totalorder %s92, %s95
      %p104 = scmp.eq.s32.totalorder %s23, 1
      %p105 = por %p103, %p104
      %p106 = scmp.ne.s32.totalorder %s95, %s96
      %p107 = scmp.eq.s32.totalorder %s23, 0
      %p108 = por %p106, %p107
      %p109 = scmp.ne.s32.totalorder %s95, %s96
      %p110 = scmp.eq.s32.totalorder %s24, 1
      %p111 = por %p109, %p110
      %p113 = scmp.ne.s32.totalorder %s96, %s112
      %p114 = scmp.eq.s32.totalorder %s24, 0
      %p115 = por %p113, %p114
      %s116 = ssub.s32 %s25, %s37
      %s117 = ssub.s32 %s26, %s33
      %s118 = sor.u32 %s116, %s117
      %p119 = scmp.eq.s32.totalorder %s118, 0
      %s121 = sadd.s32 %s120, 1
      %s122 = scalar_select %p119, %s120, %s121
      %p125 = pneg %p119
      %p126 = scmp.eq.s32.totalorder %s18, 1
      %p127 = por %p125, %p126
      %p128 = scmp.ne.s32.totalorder %s120, %s123
      %p129 = scmp.eq.s32.totalorder %s18, 0
      %p130 = por %p128, %p129
      %p131 = scmp.ne.s32.totalorder %s120, %s123
      %p132 = scmp.eq.s32.totalorder %s23, 1
      %p133 = por %p131, %p132
      %p134 = scmp.ne.s32.totalorder %s123, %s124
      %p135 = scmp.eq.s32.totalorder %s23, 0
      %p136 = por %p134, %p135
      %p137 = scmp.ne.s32.totalorder %s123, %s124
      %p138 = scmp.eq.s32.totalorder %s24, 1
      %p139 = por %p137, %p138
      %p141 = scmp.ne.s32.totalorder %s124, %s140
      %p142 = scmp.eq.s32.totalorder %s24, 0
      %p143 = por %p141, %p142
      %s144 = ssub.s32 %s25, %s37
      %p145 = scmp.eq.s32.totalorder %s144, 0
      %s147 = sadd.s32 %s146, 1
      %s148 = scalar_select %p145, %s146, %s147
      %p151 = pneg %p145
      %p152 = scmp.eq.s32.totalorder %s18, 1
      %p153 = por %p151, %p152
      %p154 = scmp.ne.s32.totalorder %s146, %s149
      %p155 = scmp.eq.s32.totalorder %s18, 0
      %p156 = por %p154, %p155
      %p157 = scmp.ne.s32.totalorder %s146, %s149
      %p158 = scmp.eq.s32.totalorder %s23, 1
      %p159 = por %p157, %p158
      %p160 = scmp.ne.s32.totalorder %s149, %s150
      %p161 = scmp.eq.s32.totalorder %s23, 0
      %p162 = por %p160, %p161
      %p163 = scmp.ne.s32.totalorder %s149, %s150
      %p164 = scmp.eq.s32.totalorder %s24, 1
      %p165 = por %p163, %p164
      %p167 = scmp.ne.s32.totalorder %s150, %s166
      %p168 = scmp.eq.s32.totalorder %s24, 0
      %p169 = por %p167, %p168
      %p170 = scmp.le.s32.totalorder 1, %s18
      %p171 = scmp.lt.s32.totalorder %s18, 3
      %p172 = pnand %p170, %p171
      %p173 = pneg %p172
      // Predicated region
      $region9: #{tpu_custom_call.1} parent=5 // pred_check
        _
      $region10: #{tpu_custom_call.1} parent=5 // pred_check_branch
        %175 = sbr.rel (%p172) target = $region12
      $region11: #{tpu_custom_call.1} parent=5 // pred_region
        %s176 = ssub.s32 %s18, 1
        // Predicated region
        $region13: #{tpu_custom_call.1} parent=11 // pred_check
          %p177 = pneg %p82
        $region14: #{tpu_custom_call.1} parent=11 // pred_check_branch
          %179 = sbr.rel (%p177) target = $region16
        $region15: #{tpu_custom_call.1} parent=11 // pred_region
          %s181 = ssub.s32 512, 512
          %182 = vsyncadd [#allocation8], %s181
          %s183 = smul.addr %s28, 128
          %s184 = scalar_lea.hbm %s1, %s183
          %s185 = sshll.u32 [#allocation7], 4
          %s186 = int_to_ptr.vmem [resolvable:$true] %s185
          %191 = dma.hbm_to_vmem [thread:$0]  %s184, 512, %s186, [#allocation8], 128, 128, 8
        $region16: #{tpu_custom_call.1} parent=11 // pred_fallthru
          _
        // Predicated region
        $region17: #{tpu_custom_call.1} parent=11 // pred_check
          %p192 = pneg %p108
        $region18: #{tpu_custom_call.1} parent=11 // pred_check_branch
          %194 = sbr.rel (%p192) target = $region20
        $region19: #{tpu_custom_call.1} parent=11 // pred_region
          %p195 = scmp.lt.s32.totalorder %s28, 0
          %s196 = scalar_select %p195, %s28, 0
          %s197 = scalar_lea.vmem %s2, %s196
        $region20: #{tpu_custom_call.1} parent=11 // pred_fallthru
          _
      $region12: #{tpu_custom_call.1} parent=5 // pred_fallthru
        _
      %p198 = scmp.lt.s32.totalorder %s18, 2
      // Predicated region
      $region21: #{tpu_custom_call.1} parent=5 // pred_check
        %p199 = pneg %p198
      $region22: #{tpu_custom_call.1} parent=5 // pred_check_branch
        %201 = sbr.rel (%p199) target = $region24
      $region23: #{tpu_custom_call.1} parent=5 // pred_region
        // Predicated region
        $region25: #{tpu_custom_call.1} parent=23 // pred_check
          %p202 = pneg %p50
        $region26: #{tpu_custom_call.1} parent=23 // pred_check_branch
          %204 = sbr.rel (%p202) target = $region28
        $region27: #{tpu_custom_call.1} parent=23 // pred_region
          %s205 = sand.u32 %s40, 1
          %s206 = scalar_lea.sflag [#allocation5], %s205
          %s207 = sand.u32 %s40, 1
          %s208 = smul.addr %s207, 8
          %s209 = scalar_lea.vmem [#allocation4], %s208
          %s211 = ssub.s32 128, 128
          %212 = vsyncadd %s206, %s211
          %s213 = smul.addr %s25, 128
          %s214 = scalar_lea.hbm %s0, %s213
          %s216 = sshll.u32 %s209, 4
          %s217 = int_to_ptr.vmem [resolvable:$true] %s216
          %219 = dma.hbm_to_vmem [thread:$0]  %s214, 128, %s217, %s206
        $region28: #{tpu_custom_call.1} parent=23 // pred_fallthru
          _
      $region24: #{tpu_custom_call.1} parent=5 // pred_fallthru
        _
      %p220 = scmp.le.s32.totalorder 1, %s18
      %p221 = scmp.lt.s32.totalorder %s18, 3
      %p222 = pnand %p220, %p221
      %p223 = pneg %p222
      // Predicated region
      $region29: #{tpu_custom_call.1} parent=5 // pred_check
        _
      $region30: #{tpu_custom_call.1} parent=5 // pred_check_branch
        %225 = sbr.rel (%p222) target = $region32
      $region31: #{tpu_custom_call.1} parent=5 // pred_region
        %s226 = ssub.s32 %s18, 1
        %s227 = sand.u32 %s43, 1
        %s228 = scalar_lea.sflag [#allocation5], %s227
        %s229 = sand.u32 %s43, 1
        %s230 = smul.addr %s229, 8
        %s231 = scalar_lea.vmem [#allocation4], %s230
        // Predicated region
        $region33: #{tpu_custom_call.1} parent=31 // pred_check
          %p232 = pneg %p56
        $region34: #{tpu_custom_call.1} parent=31 // pred_check_branch
          %234 = sbr.rel (%p232) target = $region36
        $region35: #{tpu_custom_call.1} parent=31 // pred_region
          %235 = dma.done %s228, 128
        $region36: #{tpu_custom_call.1} parent=31 // pred_fallthru
          _
        // Predicated region
        $region37: #{tpu_custom_call.1} parent=31 // pred_check
          %p236 = pneg %p82
        $region38: #{tpu_custom_call.1} parent=31 // pred_check_branch
          %238 = sbr.rel (%p236) target = $region40
        $region39: #{tpu_custom_call.1} parent=31 // pred_region
          %239 = dma.done [#allocation8], 512
        $region40: #{tpu_custom_call.1} parent=31 // pred_fallthru
          _
        %s240 = sand.u32 %s43, 1
        %s241 = scalar_lea.sflag [#allocation5], %s240
        %s242 = sand.u32 %s43, 1
        %s243 = smul.addr %s242, 8
        %s244 = scalar_lea.vmem [#allocation4], %s243
        %p245 = pneg %p56
        %p246 = pneg %p53
        %p247 = pneg %p82
        %p248 = pneg %p79
        %p249 = scmp.lt.s32.totalorder %s28, 0
        %s250 = scalar_select %p249, %s28, 0
        %s251 = scalar_lea.vmem %s2, %s250
        %p252 = pneg %p108
        %p253 = pneg %p105
        %p254 = pneg %p136
        %p255 = pneg %p133
        %s256 = sand.u32 %s123, 1
        %s257 = scalar_lea.sflag [#allocation6], %s256
        %s258 = sand.u32 %s123, 1
        %s259 = smul.addr %s258, 8
        %s260 = scalar_lea.vmem [#allocation9], %s259
        %p261 = pneg %p162
        %p262 = pneg %p159
        %p263 = scmp.lt.s32.totalorder %s27, 1
        %s264 = scalar_select %p263, %s27, 1
        %s265 = smul.addr %s264, 8
        %s266 = scalar_lea.vmem %s4, %s265
        %p267 = scmp.lt.s32.totalorder %s28, 0
        %s268 = scalar_select %p267, %s28, 0
        %s269 = scalar_lea.vmem %s2, %s268
        %p270 = scmp.lt.s32.totalorder %s27, 1
        %s271 = scalar_select %p270, %s27, 1
        %s272 = smul.addr %s271, 8
        %s273 = scalar_lea.vmem %s4, %s272
        %p274 = scmp.eq.s32.totalorder %s28, 0
        // Predicated region
        $region41: #{tpu_custom_call.1} parent=31 // pred_check
          %p275 = pneg %p274
        $region42: #{tpu_custom_call.1} parent=31 // pred_check_branch
          %277 = sbr.rel (%p275) target = $region44
        $region43: #{tpu_custom_call.1} parent=31 // pred_region
          %vm278 = vcmask 7168
          %279 = vst.msk [vmem:[#allocation2] sm:$0xff] %vm278, -1e+30
          %280 = vst.msk [vmem:[#allocation3] sm:$0xff] %vm278, 0.0
        $region44: #{tpu_custom_call.1} parent=31 // pred_fallthru
          _
        %v281 = vld [vmem:[%s231] sm:$0xff]
        %v282 = vld [vmem:[#allocation7] sm:$0xff]
        %v283 = vld [vmem:[#allocation7 + $0x8] sm:$0xff]
        %v284 = vld [vmem:[#allocation7 + $0x10] sm:$0xff]
        %v285 = vld [vmem:[#allocation7 + $0x18] sm:$0xff]
        %v286 = vld [vmem:[%s269] sm:$0x1]
        %v288 = vlaneseq
        %v289 = vshrl.u32 %v288, 7
        %v290 = vsub.s32 0, %v289
        %v291 = vrot.slane %v286, %v290
        %vm293 = vcmask 261120
        %v295 = vsel %vm293, %v281, 0
        %297 = vmatprep.subr.mxu0 0.0
        %298 = vmatpush1.msra.mxu0 %v282
        %299 = vmatprep.subr.mxu0 0.0
        %300 = vmatpush1.msra.mxu0 %v283
        %301 = vmatprep.subr.mxu0 0.0
        %302 = vmatpush1.msra.mxu0 %v284
        %303 = vmatprep.subr.mxu0 0.0
        %304 = vmatpush1.msra.mxu0 %v285
        %305 = vmatprep.subr.mxu0 0.0
        %306 = vmatpush1.msra.mxu0 0.0
        %307 = vmatprep.subr.mxu0 0.0
        %308 = vmatpush1.msra.mxu0 0.0
        %309 = vmatprep.subr.mxu0 0.0
        %310 = vmatpush1.msra.mxu0 0.0
        %311 = vmatprep.subr.mxu0 0.0
        %312 = vmatpush1.msra.mxu0 0.0
        %313 = vmatprep.subr.mxu0 0.0
        %314 = vmatpush1.msra.mxu0 0.0
        %315 = vmatprep.subr.mxu0 0.0
        %316 = vmatpush1.msra.mxu0 0.0
        %317 = vmatprep.subr.mxu0 0.0
        %318 = vmatpush1.msra.mxu0 0.0
        %319 = vmatprep.subr.mxu0 0.0
        %320 = vmatpush1.msra.mxu0 0.0
        %321 = vmatprep.subr.mxu0 0.0
        %322 = vmatpush1.msra.mxu0 0.0
        %323 = vmatprep.subr.mxu0 0.0
        %324 = vmatpush1.msra.mxu0 0.0
        %325 = vmatprep.subr.mxu0 0.0
        %326 = vmatpush1.msra.mxu0 0.0
        %327 = vmatprep.subr.mxu0 0.0
        %328 = vmatpush1.msra.mxu0 0.0
        %329 = vmatprep.subr.mxu0 0.0
        %330 = vmatpush1.msra.mxu0 0.0
        %331 = vmatprep.subr.mxu0 0.0
        %332 = vmatpush1.msra.mxu0 0.0
        %333 = vmatprep.subr.mxu0 0.0
        %334 = vmatpush1.msra.mxu0 0.0
        %335 = vmatprep.subr.mxu0 0.0
        %336 = vmatpush1.msra.mxu0 0.0
        %337 = vmatprep.subr.mxu0 0.0
        %338 = vmatpush1.msra.mxu0 0.0
        %339 = vmatprep.subr.mxu0 0.0
        %340 = vmatpush1.msra.mxu0 0.0
        %341 = vmatprep.subr.mxu0 0.0
        %342 = vmatpush1.msra.mxu0 0.0
        %343 = vmatprep.subr.mxu0 0.0
        %344 = vmatpush1.msra.mxu0 0.0
        %345 = vmatprep.subr.mxu0 0.0
        %346 = vmatpush1.msra.mxu0 0.0
        %347 = vmatprep.subr.mxu0 0.0
        %348 = vmatpush1.msra.mxu0 0.0
        %349 = vmatprep.subr.mxu0 0.0
        %350 = vmatpush1.msra.mxu0 0.0
        %351 = vmatprep.subr.mxu0 0.0
        %352 = vmatpush1.msra.mxu0 0.0
        %353 = vmatprep.subr.mxu0 0.0
        %354 = vmatpush1.msra.mxu0 0.0
        %355 = vmatprep.subr.mxu0 0.0
        %356 = vmatpush1.msra.mxu0 0.0
        %357 = vmatprep.subr.mxu0 0.0
        %358 = vmatpush1.msra.mxu0 0.0
        %359 = vmatprep.subr.mxu0 0.0
        %360 = vmatpush1.msra.mxu0 0.0
        %361 = vmatprep.mubr.f32.mxu0 0.0
        %362 = vmatmul.mubr.f32.gmra.mrb[0].mxu0 %v295
        %v363 = vpop.f32.mrb[0].mxu0
        %v364 = vadd.f32 %v291, %v363
        %v365 = vpop.f32.mrb[0].mxu0
        %366 = vdwg.mxu0
        %367 = vst [vmem:[%s260] sm:$0xff] %v364
        %v368 = vld [vmem:[#allocation2] sm:$0xff]
        %369 = vmax.xlane.f32.xlu0 %v364
        %v370 = vpop.xlane.xlu0 %369
        %v371 = vmax.f32 %v368, %v370
        %v372 = vld [vmem:[#allocation3] sm:$0xff]
        %v373 = vsub.f32 %v368, %v371
        %v374 = vmul.f32 %v373, 1.442695
        %v375 = vpow.pop %v374
        %v376 = vmul.f32 %v372, %v375
        %378 = vset.pattern.permute.xlu0 0
        %379 = vperm.xlu0 %378, %v371
        %v380 = vpop.permute.xlu0 %379
        %v382 = vsub.f32 %v364, %v380
        %v383 = vmul.f32 %v382, 1.442695
        %v384 = vpow.pop %v383
        %385 = vadd.xlane.f32.xlu0 %v384
        %v386 = vpop.xlane.xlu0 %385
        %v387 = vadd.f32 %v376, %v386
        %vm388 = vcmask 7168
        %389 = vst.msk [vmem:[#allocation3] sm:$0xff] %vm388, %v387
        %390 = vst.msk [vmem:[#allocation2] sm:$0xff] %vm388, %v371
        // Predicated region
        $region45: #{tpu_custom_call.1} parent=31 // pred_check
          %p391 = pneg %p274
        $region46: #{tpu_custom_call.1} parent=31 // pred_check_branch
          %393 = sbr.rel (%p391) target = $region48
        $region47: #{tpu_custom_call.1} parent=31 // pred_region
          %v394 = vld [vmem:[#allocation2] sm:$0xff]
          %v395 = vld [vmem:[#allocation3] sm:$0xff]
          %v396 = vlog2.pop %v395
          %v397 = vmul.f32 %v396, 0.6931472
          %v398 = vadd.f32 %v394, %v397
          %399 = vst.msk [vmem:[%s273] sm:$0xff] %vm388, %v398
        $region48: #{tpu_custom_call.1} parent=31 // pred_fallthru
          _
        %s400 = sand.u32 %s123, 1
        %s401 = scalar_lea.sflag [#allocation6], %s400
        %s402 = sand.u32 %s123, 1
        %s403 = smul.addr %s402, 8
        %s404 = scalar_lea.vmem [#allocation9], %s403
        %p405 = scmp.lt.s32.totalorder %s27, 1
        %s406 = scalar_select %p405, %s27, 1
        %s407 = smul.addr %s406, 8
        %s408 = scalar_lea.vmem %s4, %s407
        // Predicated region
        $region49: #{tpu_custom_call.1} parent=31 // pred_check
          %p409 = pneg %p133
        $region50: #{tpu_custom_call.1} parent=31 // pred_check_branch
          %411 = sbr.rel (%p409) target = $region52
        $region51: #{tpu_custom_call.1} parent=31 // pred_region
          %s413 = ssub.s32 128, 128
          %414 = vsyncadd %s401, %s413
          %s415 = sadd.s32 %s28, %s27
          %s416 = smul.addr %s415, 128
          %s417 = scalar_lea.hbm %s3, %s416
          %s419 = sshll.u32 %s404, 4
          %s420 = int_to_ptr.vmem [resolvable:$true] %s419
          %422 = dma.vmem_to_hbm [thread:$0]  %s420, 128, %s417, %s401
        $region52: #{tpu_custom_call.1} parent=31 // pred_fallthru
          _
        // Predicated region
        $region53: #{tpu_custom_call.1} parent=31 // pred_check
          %p423 = pneg %p159
        $region54: #{tpu_custom_call.1} parent=31 // pred_check_branch
          %425 = sbr.rel (%p423) target = $region56
        $region55: #{tpu_custom_call.1} parent=31 // pred_region
          _
        $region56: #{tpu_custom_call.1} parent=31 // pred_fallthru
          _
      $region32: #{tpu_custom_call.1} parent=5 // pred_fallthru
        _
      %p426 = scmp.le.s32.totalorder 2, %s18
      // Predicated region
      $region57: #{tpu_custom_call.1} parent=5 // pred_check
        %p427 = pneg %p426
      $region58: #{tpu_custom_call.1} parent=5 // pred_check_branch
        %429 = sbr.rel (%p427) target = $region60
      $region59: #{tpu_custom_call.1} parent=5 // pred_region
        %s430 = ssub.s32 %s18, 2
        // Predicated region
        $region61: #{tpu_custom_call.1} parent=59 // pred_check
          %p431 = pneg %p139
        $region62: #{tpu_custom_call.1} parent=59 // pred_check_branch
          %433 = sbr.rel (%p431) target = $region64
        $region63: #{tpu_custom_call.1} parent=59 // pred_region
          %s434 = sand.u32 %s124, 1
          %s435 = scalar_lea.sflag [#allocation6], %s434
          %s436 = sand.u32 %s124, 1
          %s437 = smul.addr %s436, 8
          %s438 = scalar_lea.vmem [#allocation9], %s437
          %439 = dma.done %s435, 128
        $region64: #{tpu_custom_call.1} parent=59 // pred_fallthru
          _
        // Predicated region
        $region65: #{tpu_custom_call.1} parent=59 // pred_check
          %p440 = pneg %p165
        $region66: #{tpu_custom_call.1} parent=59 // pred_check_branch
          %442 = sbr.rel (%p440) target = $region68
        $region67: #{tpu_custom_call.1} parent=59 // pred_region
          %p443 = scmp.lt.s32.totalorder %s29, 1
          %s444 = scalar_select %p443, %s29, 1
          %s445 = smul.addr %s444, 8
          %s446 = scalar_lea.vmem %s4, %s445
        $region68: #{tpu_custom_call.1} parent=59 // pred_fallthru
          _
      $region60: #{tpu_custom_call.1} parent=5 // pred_fallthru
        _
    $region6: #{tpu_custom_call.1} parent=1 // loop_footer
      %s22 = sadd.s32 1, %s18
    $region7: #{tpu_custom_call.1} parent=1 // loop_footer_branch
      %17 = sbr.rel target = $region3
    $region8: #{tpu_custom_call.1} parent=1 // loop_exit
      _
    %447 = vsyncpa [#allocation5], 1
    %s448 = scalar_lea.sflag [#allocation5], 1
    %449 = vsyncpa %s448, 1
    %450 = vsyncpa [#allocation8], 1
    %451 = vsyncpa [#allocation6], 1
    %s452 = scalar_lea.sflag [#allocation6], 1
    %453 = vsyncpa %s452, 1

</llo_original>
